<compile_context>
chip_gen: v5e
topology: v5e:2x2
jax: 0.10.0
libtpu: 0.0.40
codegen_flags: <defaults>
</compile_context>

<pallas_src>
import jax
import jax.numpy as jnp
from jax.experimental import pallas as pl
from jax.experimental.pallas import tpu as pltpu


def _mlp_kernel(x_ref, w1_ref, b1_ref, w2_ref, b2_ref, w3_ref, b3_ref, o_ref):
    # x tile arrives f32 from HBM; cast to bf16 in-register for the MXU.
    x = x_ref[...].astype(jnp.bfloat16)

    # Linear 1 + Sigmoid  (MXU dot, EUP exp, EUP approx reciprocal)
    h1 = jnp.dot(x, w1_ref[...], preferred_element_type=jnp.float32) + b1_ref[...]
    h1 = jnp.clip(h1, -30.0, 30.0)                      # keep exp() finite
    h1 = pl.reciprocal(1.0 + jnp.exp(-h1), approx=True)

    # Linear 2 + ReLU
    h2 = jnp.dot(h1.astype(w2_ref.dtype), w2_ref[...],
                 preferred_element_type=jnp.float32) + b2_ref[...]
    h2 = jnp.maximum(h2, 0.0)

    # Linear 3 (no activation)
    out = jnp.dot(h2.astype(w3_ref.dtype), w3_ref[...],
                  preferred_element_type=jnp.float32) + b3_ref[...]
    o_ref[...] = out.astype(o_ref.dtype)


def init_params(key, input_dim=1024, hidden_dim=256, output_dim=1024,
                dtype=jnp.float32):
    """Deterministic synthetic init (PyTorch-Linear-like uniform ranges)."""
    ks = jax.random.split(key, 6)

    def linear(kw, kb, fan_in, fan_out):
        bound = 1.0 / jnp.sqrt(jnp.float32(fan_in))
        # Stored as [in, out] (transposed vs. torch's [out, in]) so the kernel
        # computes x @ W without a transpose.
        w = jax.random.uniform(kw, (fan_in, fan_out), dtype, -bound, bound)
        b = jax.random.uniform(kb, (1, fan_out), dtype, -bound, bound)
        return w, b

    w1, b1 = linear(ks[0], ks[1], input_dim, hidden_dim)
    w2, b2 = linear(ks[2], ks[3], hidden_dim, hidden_dim)
    w3, b3 = linear(ks[4], ks[5], hidden_dim, output_dim)
    return (w1, b1, w2, b2, w3, b3)


def _as_dtype(a, dt):
    return a if a.dtype == dt else a.astype(dt)


def prepare_params(params):
    """One-time cast: weights -> bf16 (MXU operands), biases -> f32.

    Do this once at load time instead of per forward call so no per-call HBM
    pass re-reads f32 weights just to down-cast them."""
    w1, b1, w2, b2, w3, b3 = params
    cast_w = lambda w: _as_dtype(w, jnp.bfloat16)
    cast_b = lambda b: _as_dtype(b, jnp.float32)
    return (cast_w(w1), cast_b(b1), cast_w(w2), cast_b(b2), cast_w(w3), cast_b(b3))


def _round_up(n, m):
    return ((n + m - 1) // m) * m


def hc_feature_learner(x, params, *, batch_tile=512, out_dtype=jnp.bfloat16):
    """Forward pass of HCFeatureLearner.

    x: [B, ...] flattened to [B, input_dim] (f32 read directly by the kernel).
    params: ideally already passed through `prepare_params` (no-op casts
    otherwise). Returns [B, output_dim] in `out_dtype` (bf16 by default)."""
    w1, b1, w2, b2, w3, b3 = prepare_params(params)  # no-op if already prepared

    B = x.shape[0]
    x2 = x.reshape(B, -1)                                 # nn.Flatten (view)
    input_dim = x2.shape[1]
    assert input_dim == w1.shape[0]
    hidden_dim = w1.shape[1]
    output_dim = w3.shape[1]

    # Batch tiling (no jnp.pad: Pallas masks the ragged last block; rows are
    # independent through all three matmuls so this is safe).
    if B <= 8:
        tm = B                                    # single full-batch block
    else:
        # >= 2 tiles so both v7x TensorCores get work; rows aligned to 8.
        tm = min(batch_tile, _round_up(pl.cdiv(B, 2), 8))
    grid = (pl.cdiv(B, tm),)

    def resident(shape):
        # Constant index_map: block never changes -> stays VMEM-resident.
        return pl.BlockSpec(shape, lambda i: (0, 0))

    flops = 2 * B * (input_dim * hidden_dim
                     + hidden_dim * hidden_dim
                     + hidden_dim * output_dim)
    transcendentals = 2 * B * hidden_dim          # exp + approx reciprocal
    weight_bytes = sum(int(a.size) * a.dtype.itemsize
                       for a in (w1, b1, w2, b2, w3, b3))
    bytes_accessed = (B * input_dim * x2.dtype.itemsize
                      + B * output_dim * jnp.dtype(out_dtype).itemsize
                      + weight_bytes)

    out = pl.pallas_call(
        _mlp_kernel,
        out_shape=jax.ShapeDtypeStruct((B, output_dim), out_dtype),
        grid=grid,
        in_specs=[
            pl.BlockSpec((tm, input_dim), lambda i: (i, 0)),
            resident(w1.shape), resident(b1.shape),
            resident(w2.shape), resident(b2.shape),
            resident(w3.shape), resident(b3.shape),
        ],
        out_specs=pl.BlockSpec((tm, output_dim), lambda i: (i, 0)),
        compiler_params=pltpu.CompilerParams(
            dimension_semantics=("parallel",),
            # 32 MiB is safe on all generations (v7x has 64 MiB physical VMEM;
            # keep any future increase under ~48 MiB there).
            vmem_limit_bytes=32 * 1024 * 1024),
        cost_estimate=pl.CostEstimate(
            flops=flops,
            transcendentals=transcendentals,
            bytes_accessed=bytes_accessed),
    )(x2, w1, b1, w2, b2, w3, b3)

    return out


def _reference(x, params):
    w1, b1, w2, b2, w3, b3 = params
    x2 = x.reshape(x.shape[0], -1).astype(jnp.float32)
    h1 = jax.nn.sigmoid(x2 @ w1 + b1)
    h2 = jax.nn.relu(h1 @ w2 + b2)
    return h2 @ w3 + b3


if __name__ == "__main__":
    key = jax.random.PRNGKey(0)
    kx, kp = jax.random.split(key)

    # [B, C, H, W] = [2, 4, 16, 16]  ->  Flatten  ->  [2, 1024]  (input_dim=1024)
    x = jax.random.normal(kx, (2, 4, 16, 16), dtype=jnp.float32)
    params = init_params(kp, input_dim=1024, hidden_dim=256, output_dim=1024)

    prepped = prepare_params(params)             # one-time weight cast
    y = hc_feature_learner(x, prepped)
    y = jax.block_until_ready(y)

    y_ref = _reference(x, params)
    assert y.shape == (2, 1024)
    assert y.dtype == jnp.bfloat16
    # bf16 MXU operands + bf16 output + approx reciprocal -> loosened tolerance
    # vs the f32 reference.
    assert jnp.allclose(y.astype(jnp.float32), y_ref, atol=3e-2, rtol=3e-2)

    print("KERNEL_OK")
</pallas_src>

<mosaic_0001>
module attributes {stable_mosaic.version = 11 : i64} {
  func.func @_mlp_kernel(%arg0: i32, %arg1: memref<2x1024xf32, #tpu.memory_space<vmem>>, %arg2: memref<1024x256xbf16, #tpu.memory_space<vmem>>, %arg3: memref<1x256xf32, #tpu.memory_space<vmem>>, %arg4: memref<256x256xbf16, #tpu.memory_space<vmem>>, %arg5: memref<1x256xf32, #tpu.memory_space<vmem>>, %arg6: memref<256x1024xbf16, #tpu.memory_space<vmem>>, %arg7: memref<1x1024xf32, #tpu.memory_space<vmem>>, %arg8: memref<2x1024xbf16, #tpu.memory_space<vmem>>) attributes {dimension_semantics = [#tpu.dimension_semantics<parallel>], iteration_bounds = array<i64: 1>, scalar_prefetch = 0 : i64, scratch_operands = 0 : i64, tpu.core_type = #tpu.core_type<tc>, window_params = [{transform_indices = @transform_0, window_bounds = array<i64: 2, 1024>}, {pipeline_mode = #tpu.pipeline_mode<synchronous>, transform_indices = @transform_1, window_bounds = array<i64: 1024, 256>}, {pipeline_mode = #tpu.pipeline_mode<synchronous>, transform_indices = @transform_2, window_bounds = array<i64: 1, 256>}, {pipeline_mode = #tpu.pipeline_mode<synchronous>, transform_indices = @transform_3, window_bounds = array<i64: 256, 256>}, {pipeline_mode = #tpu.pipeline_mode<synchronous>, transform_indices = @transform_4, window_bounds = array<i64: 1, 256>}, {pipeline_mode = #tpu.pipeline_mode<synchronous>, transform_indices = @transform_5, window_bounds = array<i64: 256, 1024>}, {pipeline_mode = #tpu.pipeline_mode<synchronous>, transform_indices = @transform_6, window_bounds = array<i64: 1, 1024>}, {transform_indices = @transform_7, window_bounds = array<i64: 2, 1024>}]} {
    %c0 = arith.constant 0 : index
    %c0_0 = arith.constant 0 : index
    %0 = vector.load %arg1[%c0, %c0_0] : memref<2x1024xf32, #tpu.memory_space<vmem>>, vector<2x1024xf32>
    %1 = arith.truncf %0 : vector<2x1024xf32> to vector<2x1024xbf16>
    %c0_1 = arith.constant 0 : index
    %c0_2 = arith.constant 0 : index
    %2 = vector.load %arg2[%c0_1, %c0_2] : memref<1024x256xbf16, #tpu.memory_space<vmem>>, vector<1024x256xbf16>
    %cst = arith.constant dense<0.000000e+00> : vector<2x256xf32>
    %3 = tpu.matmul %1, %2, %cst {dimension_numbers = #tpu.dot_dimension_numbers<[1], [0], [0], [1], [0, 0, 1, 1], [], []>} : vector<2x1024xbf16>, vector<1024x256xbf16>, vector<2x256xf32> -> vector<2x256xf32>
    %c0_3 = arith.constant 0 : index
    %c0_4 = arith.constant 0 : index
    %4 = vector.load %arg3[%c0_3, %c0_4] : memref<1x256xf32, #tpu.memory_space<vmem>>, vector<1x256xf32>
    %5 = vector.broadcast %4 : vector<1x256xf32> to vector<2x256xf32>
    %6 = arith.addf %3, %5 : vector<2x256xf32>
    %cst_5 = arith.constant -3.000000e+01 : f32
    %cst_6 = arith.constant 3.000000e+01 : f32
    %7 = vector.broadcast %cst_5 : f32 to vector<2x256xf32>
    %8 = arith.maximumf %7, %6 : vector<2x256xf32>
    %9 = vector.broadcast %cst_6 : f32 to vector<2x256xf32>
    %10 = arith.minimumf %9, %8 : vector<2x256xf32>
    %cst_7 = arith.constant 0.000000e+00 : f32
    %11 = vector.broadcast %cst_7 : f32 to vector<2x256xf32>
    %12 = arith.subf %11, %10 : vector<2x256xf32>
    %13 = math.exp %12 : vector<2x256xf32>
    %cst_8 = arith.constant 1.000000e+00 : f32
    %14 = vector.broadcast %cst_8 : f32 to vector<2x256xf32>
    %15 = arith.addf %14, %13 : vector<2x256xf32>
    %16 = tpu.reciprocal %15 {approx = true} : vector<2x256xf32> -> vector<2x256xf32>
    %17 = arith.truncf %16 : vector<2x256xf32> to vector<2x256xbf16>
    %c0_9 = arith.constant 0 : index
    %c0_10 = arith.constant 0 : index
    %18 = vector.load %arg4[%c0_9, %c0_10] : memref<256x256xbf16, #tpu.memory_space<vmem>>, vector<256x256xbf16>
    %cst_11 = arith.constant dense<0.000000e+00> : vector<2x256xf32>
    %19 = tpu.matmul %17, %18, %cst_11 {dimension_numbers = #tpu.dot_dimension_numbers<[1], [0], [0], [1], [0, 0, 1, 1], [], []>} : vector<2x256xbf16>, vector<256x256xbf16>, vector<2x256xf32> -> vector<2x256xf32>
    %c0_12 = arith.constant 0 : index
    %c0_13 = arith.constant 0 : index
    %20 = vector.load %arg5[%c0_12, %c0_13] : memref<1x256xf32, #tpu.memory_space<vmem>>, vector<1x256xf32>
    %21 = vector.broadcast %20 : vector<1x256xf32> to vector<2x256xf32>
    %22 = arith.addf %19, %21 : vector<2x256xf32>
    %cst_14 = arith.constant 0.000000e+00 : f32
    %23 = vector.broadcast %cst_14 : f32 to vector<2x256xf32>
    %24 = arith.maximumf %22, %23 : vector<2x256xf32>
    %25 = arith.truncf %24 : vector<2x256xf32> to vector<2x256xbf16>
    %c0_15 = arith.constant 0 : index
    %c0_16 = arith.constant 0 : index
    %26 = vector.load %arg6[%c0_15, %c0_16] : memref<256x1024xbf16, #tpu.memory_space<vmem>>, vector<256x1024xbf16>
    %cst_17 = arith.constant dense<0.000000e+00> : vector<2x1024xf32>
    %27 = tpu.matmul %25, %26, %cst_17 {dimension_numbers = #tpu.dot_dimension_numbers<[1], [0], [0], [1], [0, 0, 1, 1], [], []>} : vector<2x256xbf16>, vector<256x1024xbf16>, vector<2x1024xf32> -> vector<2x1024xf32>
    %c0_18 = arith.constant 0 : index
    %c0_19 = arith.constant 0 : index
    %28 = vector.load %arg7[%c0_18, %c0_19] : memref<1x1024xf32, #tpu.memory_space<vmem>>, vector<1x1024xf32>
    %29 = vector.broadcast %28 : vector<1x1024xf32> to vector<2x1024xf32>
    %30 = arith.addf %27, %29 : vector<2x1024xf32>
    %31 = arith.truncf %30 : vector<2x1024xf32> to vector<2x1024xbf16>
    %c0_20 = arith.constant 0 : index
    %c0_21 = arith.constant 0 : index
    %32 = vector.load %arg8[%c0_20, %c0_21] : memref<2x1024xbf16, #tpu.memory_space<vmem>>, vector<2x1024xbf16>
    tpu.vector_store %arg8[%c0_20, %c0_21], %31 {strides = array<i32>} : memref<2x1024xbf16, #tpu.memory_space<vmem>>, vector<2x1024xbf16>,
    return
  }
  func.func @transform_0(%arg0: i32) -> (i32, i32) {
    %c0_i32 = arith.constant 0 : i32
    %c0_i32_0 = arith.constant 0 : i32
    return %arg0, %c0_i32 : i32, i32
  }
  func.func @transform_1(%arg0: i32) -> (i32, i32) {
    %c0_i32 = arith.constant 0 : i32
    %c0_i32_0 = arith.constant 0 : i32
    %c0_i32_1 = arith.constant 0 : i32
    return %c0_i32, %c0_i32_0 : i32, i32
  }
  func.func @transform_2(%arg0: i32) -> (i32, i32) {
    %c0_i32 = arith.constant 0 : i32
    %c0_i32_0 = arith.constant 0 : i32
    %c0_i32_1 = arith.constant 0 : i32
    return %c0_i32, %c0_i32_0 : i32, i32
  }
  func.func @transform_3(%arg0: i32) -> (i32, i32) {
    %c0_i32 = arith.constant 0 : i32
    %c0_i32_0 = arith.constant 0 : i32
    %c0_i32_1 = arith.constant 0 : i32
    return %c0_i32, %c0_i32_0 : i32, i32
  }
  func.func @transform_4(%arg0: i32) -> (i32, i32) {
    %c0_i32 = arith.constant 0 : i32
    %c0_i32_0 = arith.constant 0 : i32
    %c0_i32_1 = arith.constant 0 : i32
    return %c0_i32, %c0_i32_0 : i32, i32
  }
  func.func @transform_5(%arg0: i32) -> (i32, i32) {
    %c0_i32 = arith.constant 0 : i32
    %c0_i32_0 = arith.constant 0 : i32
    %c0_i32_1 = arith.constant 0 : i32
    return %c0_i32, %c0_i32_0 : i32, i32
  }
  func.func @transform_6(%arg0: i32) -> (i32, i32) {
    %c0_i32 = arith.constant 0 : i32
    %c0_i32_0 = arith.constant 0 : i32
    %c0_i32_1 = arith.constant 0 : i32
    return %c0_i32, %c0_i32_0 : i32, i32
  }
  func.func @transform_7(%arg0: i32) -> (i32, i32) {
    %c0_i32 = arith.constant 0 : i32
    %c0_i32_0 = arith.constant 0 : i32
    return %arg0, %c0_i32 : i32, i32
  }
}

</mosaic_0001>

<llo_original>
// kernel: tpu_custom_call.1
$region0: #{tpu_custom_call.1}
  #allocation0 [shape = 'u32[]', space=smem, size = 0x4, offset = 0x4, fixed_abs, tag = 'smem constant byte address 0x4 - core index']
  #allocation1 [shape = 'u32[72,128]{1,0:T(1,128)}', space=vmem, size = 0x9000, scoped, tag = 'internal scratch']
  %s0 = inlined_call_operand.hbm [shape: f32[2,1024], index: 0, kind: input, shape index: {}]
  %s1 = inlined_call_operand.hbm [shape: bf16[1024,256], index: 1, kind: input, shape index: {}]
  %s2 = inlined_call_operand.hbm [shape: f32[1,256], index: 2, kind: input, shape index: {}]
  %s3 = inlined_call_operand.hbm [shape: bf16[256,256], index: 3, kind: input, shape index: {}]
  %s4 = inlined_call_operand.vmem [shape: f32[1,256], index: 4, kind: input, shape index: {}]
  %s5 = inlined_call_operand.hbm [shape: bf16[256,1024], index: 5, kind: input, shape index: {}]
  %s6 = inlined_call_operand.hbm [shape: f32[1,1024], index: 6, kind: input, shape index: {}]
  %s7 = inlined_call_operand.hbm [shape: bf16[2,1024], index: 7, kind: output, shape index: {}]
  %s8 = sld [smem:[#allocation0]]
  $region62: #{tpu_custom_call.1} parent=0
    _
  %s10 = ssub.s32 1, %s8
  %s11 = scalar_select 0, %s10, %s8
  $region1: #{tpu_custom_call.1} parent=0
    #allocation2 [shape = 'u8[8192]{0}', space=vmem, size = 0x2000, scoped, tag = 'input window, operand 0, single buffered']
    #allocation3 [shape = 's32[1]{0}', space=sflag, size = 0x4, scoped, tag = 'scoped memory for tpu_custom_call.1']
    #allocation4 [shape = 's32[1]{0}', space=sflag, size = 0x4, scoped, tag = 'scoped memory for tpu_custom_call.1']
    #allocation5 [shape = 'u8[524288]{0}', space=vmem, size = 0x80000, scoped, tag = 'input window, operand 1, single buffered']
    #allocation6 [shape = 's32[1]{0}', space=sflag, size = 0x4, scoped, tag = 'scoped memory for tpu_custom_call.1']
    #allocation7 [shape = 'u8[1024]{0}', space=vmem, size = 0x400, scoped, tag = 'input window, operand 2, single buffered']
    #allocation8 [shape = 'u8[131072]{0}', space=vmem, size = 0x20000, scoped, tag = 'input window, operand 3, single buffered']
    #allocation9 [shape = 's32[1]{0}', space=sflag, size = 0x4, scoped, tag = 'scoped memory for tpu_custom_call.1']
    #allocation10 [shape = 'u8[524288]{0}', space=vmem, size = 0x80000, scoped, tag = 'input window, operand 5, single buffered']
    #allocation11 [shape = 'u8[4096]{0}', space=vmem, size = 0x1000, scoped, tag = 'input window, operand 6, single buffered']
    #allocation12 [shape = 's32[1]{0}', space=sflag, size = 0x4, scoped, tag = 'scoped memory for tpu_custom_call.1']
    #allocation13 [shape = 'u8[4096]{0}', space=vmem, size = 0x1000, scoped, tag = 'output window, operand 0, single buffered']
    %12 = vsyncpa [#allocation3], 0
    %13 = vsyncpa [#allocation6], 0
    %14 = vsyncpa [#allocation9], 0
    %15 = vsyncpa [#allocation12], 0
    %16 = vsyncpa [#allocation4], 0
    // Predicated region
    $region2: #{tpu_custom_call.1} parent=1 // pred_check
      _
    $region3: #{tpu_custom_call.1} parent=1 // pred_check_branch
      %18 = sbr.rel (0) target = $region5
    $region4: #{tpu_custom_call.1} parent=1 // pred_region
      %20 = vsyncadd [#allocation3], 0
      %s22 = sshll.u32 %s0, 4
      %s23 = int_to_ptr.hbm [resolvable:$true] %s22
      %s24 = sshll.u32 [#allocation2], 4
      %s25 = int_to_ptr.vmem [resolvable:$true] %s24
      %27 = dma.hbm_to_vmem [thread:$0]  %s23, 256, %s25, [#allocation3]
    $region5: #{tpu_custom_call.1} parent=1 // pred_fallthru
      _
    // Predicated region
    $region6: #{tpu_custom_call.1} parent=1 // pred_check
      _
    $region7: #{tpu_custom_call.1} parent=1 // pred_check_branch
      %29 = sbr.rel (0) target = $region9
    $region8: #{tpu_custom_call.1} parent=1 // pred_region
      %31 = vsyncadd [#allocation6], 0
      %s32 = sshll.u32 %s1, 4
      %s33 = int_to_ptr.hbm [resolvable:$true] %s32
      %s34 = sshll.u32 [#allocation5], 4
      %s35 = int_to_ptr.vmem [resolvable:$true] %s34
      %40 = dma.hbm_to_vmem [thread:$0]  %s33, 16384, %s35, [#allocation6], 128, 128, 8
    $region9: #{tpu_custom_call.1} parent=1 // pred_fallthru
      _
    // Predicated region
    $region10: #{tpu_custom_call.1} parent=1 // pred_check
      _
    $region11: #{tpu_custom_call.1} parent=1 // pred_check_branch
      %42 = sbr.rel (0) target = $region13
    $region12: #{tpu_custom_call.1} parent=1 // pred_region
      %44 = vsyncadd [#allocation6], 0
      %s46 = sshll.u32 %s2, 4
      %s47 = int_to_ptr.hbm [resolvable:$true] %s46
      %s48 = sshll.u32 [#allocation7], 4
      %s49 = int_to_ptr.vmem [resolvable:$true] %s48
      %51 = dma.hbm_to_vmem [thread:$0]  %s47, 32, %s49, [#allocation6]
    $region13: #{tpu_custom_call.1} parent=1 // pred_fallthru
      _
    // Predicated region
    $region14: #{tpu_custom_call.1} parent=1 // pred_check
      _
    $region15: #{tpu_custom_call.1} parent=1 // pred_check_branch
      %53 = sbr.rel (0) target = $region17
    $region16: #{tpu_custom_call.1} parent=1 // pred_region
      %55 = vsyncadd [#allocation9], 0
      %s56 = sshll.u32 %s3, 4
      %s57 = int_to_ptr.hbm [resolvable:$true] %s56
      %s58 = sshll.u32 [#allocation8], 4
      %s59 = int_to_ptr.vmem [resolvable:$true] %s58
      %64 = dma.hbm_to_vmem [thread:$0]  %s57, 4096, %s59, [#allocation9], 128, 128, 8
    $region17: #{tpu_custom_call.1} parent=1 // pred_fallthru
      _
    // Predicated region
    $region18: #{tpu_custom_call.1} parent=1 // pred_check
      _
    $region19: #{tpu_custom_call.1} parent=1 // pred_check_branch
      %66 = sbr.rel (0) target = $region21
    $region20: #{tpu_custom_call.1} parent=1 // pred_region
      _
    $region21: #{tpu_custom_call.1} parent=1 // pred_fallthru
      _
    // Predicated region
    $region22: #{tpu_custom_call.1} parent=1 // pred_check
      _
    $region23: #{tpu_custom_call.1} parent=1 // pred_check_branch
      %68 = sbr.rel (0) target = $region25
    $region24: #{tpu_custom_call.1} parent=1 // pred_region
      %70 = vsyncadd [#allocation9], 0
      %s71 = sshll.u32 %s5, 4
      %s72 = int_to_ptr.hbm [resolvable:$true] %s71
      %s73 = sshll.u32 [#allocation10], 4
      %s74 = int_to_ptr.vmem [resolvable:$true] %s73
      %79 = dma.hbm_to_vmem [thread:$0]  %s72, 16384, %s74, [#allocation9], 512, 512, 32
    $region25: #{tpu_custom_call.1} parent=1 // pred_fallthru
      _
    // Predicated region
    $region26: #{tpu_custom_call.1} parent=1 // pred_check
      _
    $region27: #{tpu_custom_call.1} parent=1 // pred_check_branch
      %81 = sbr.rel (0) target = $region29
    $region28: #{tpu_custom_call.1} parent=1 // pred_region
      %83 = vsyncadd [#allocation12], 0
      %s85 = sshll.u32 %s6, 4
      %s86 = int_to_ptr.hbm [resolvable:$true] %s85
      %s87 = sshll.u32 [#allocation11], 4
      %s88 = int_to_ptr.vmem [resolvable:$true] %s87
      %90 = dma.hbm_to_vmem [thread:$0]  %s86, 128, %s88, [#allocation12]
    $region29: #{tpu_custom_call.1} parent=1 // pred_fallthru
      _
    // Predicated region
    $region30: #{tpu_custom_call.1} parent=1 // pred_check
      _
    $region31: #{tpu_custom_call.1} parent=1 // pred_check_branch
      %92 = sbr.rel (0) target = $region33
    $region32: #{tpu_custom_call.1} parent=1 // pred_region
      %94 = dma.done [#allocation3], 256
    $region33: #{tpu_custom_call.1} parent=1 // pred_fallthru
      _
    // Predicated region
    $region34: #{tpu_custom_call.1} parent=1 // pred_check
      _
    $region35: #{tpu_custom_call.1} parent=1 // pred_check_branch
      %96 = sbr.rel (0) target = $region37
    $region36: #{tpu_custom_call.1} parent=1 // pred_region
      %98 = dma.done [#allocation6], 16384
    $region37: #{tpu_custom_call.1} parent=1 // pred_fallthru
      _
    // Predicated region
    $region38: #{tpu_custom_call.1} parent=1 // pred_check
      _
    $region39: #{tpu_custom_call.1} parent=1 // pred_check_branch
      %100 = sbr.rel (0) target = $region41
    $region40: #{tpu_custom_call.1} parent=1 // pred_region
      %102 = dma.done [#allocation6], 32
    $region41: #{tpu_custom_call.1} parent=1 // pred_fallthru
      _
    // Predicated region
    $region42: #{tpu_custom_call.1} parent=1 // pred_check
      _
    $region43: #{tpu_custom_call.1} parent=1 // pred_check_branch
      %104 = sbr.rel (0) target = $region45
    $region44: #{tpu_custom_call.1} parent=1 // pred_region
      %106 = dma.done [#allocation9], 4096
    $region45: #{tpu_custom_call.1} parent=1 // pred_fallthru
      _
    // Predicated region
    $region46: #{tpu_custom_call.1} parent=1 // pred_check
      _
    $region47: #{tpu_custom_call.1} parent=1 // pred_check_branch
      %108 = sbr.rel (0) target = $region49
    $region48: #{tpu_custom_call.1} parent=1 // pred_region
      %110 = dma.done [#allocation9], 16384
    $region49: #{tpu_custom_call.1} parent=1 // pred_fallthru
      _
    // Predicated region
    $region50: #{tpu_custom_call.1} parent=1 // pred_check
      _
    $region51: #{tpu_custom_call.1} parent=1 // pred_check_branch
      %112 = sbr.rel (0) target = $region53
    $region52: #{tpu_custom_call.1} parent=1 // pred_region
      %114 = dma.done [#allocation12], 128
    $region53: #{tpu_custom_call.1} parent=1 // pred_fallthru
      _
    %v115 = vld [vmem:[#allocation2] sm:$0xff]
    %v116 = vld [vmem:[#allocation2 + $0x8] sm:$0xff]
    %119 = vst [vmem:[#allocation1] ss:$4 sm:$0xff] %v115
    %s120 = scalar_lea.vmem [#allocation1], 32
    %121 = vst [vmem:[%s120] ss:$4 sm:$0xff] %v116
    %v122 = vld.sshfl [vmem:[#allocation1] sm:$0xff pattern:$0x73625140]
    %v123 = vld.sshfl [vmem:[#allocation1 + $0x8] sm:$0xff pattern:$0x73625140]
    %v124 = vld.sshfl [vmem:[#allocation1 + $0x10] sm:$0xff pattern:$0x73625140]
    %v125 = vld.sshfl [vmem:[#allocation1 + $0x18] sm:$0xff pattern:$0x73625140]
    %v126 = vld.sshfl [vmem:[#allocation1 + $0x20] sm:$0xff pattern:$0x73625140]
    %v127 = vld.sshfl [vmem:[#allocation1 + $0x28] sm:$0xff pattern:$0x73625140]
    %v128 = vld.sshfl [vmem:[#allocation1 + $0x30] sm:$0xff pattern:$0x73625140]
    %v129 = vld.sshfl [vmem:[#allocation1 + $0x38] sm:$0xff pattern:$0x73625140]
    %v138 = vpack.c.bf16 %v122, %v122
    %v139 = vpack.c.bf16 %v123, %v123
    %v140 = vpack.c.bf16 %v124, %v124
    %v141 = vpack.c.bf16 %v125, %v125
    %v142 = vpack.c.bf16 %v126, %v126
    %v143 = vpack.c.bf16 %v127, %v127
    %v144 = vpack.c.bf16 %v128, %v128
    %v145 = vpack.c.bf16 %v129, %v129
    %v146 = vld [vmem:[#allocation5] sm:$0xff]
    %v147 = vld [vmem:[#allocation5 + $0x8] sm:$0xff]
    %v148 = vld [vmem:[#allocation5 + $0x10] sm:$0xff]
    %v149 = vld [vmem:[#allocation5 + $0x18] sm:$0xff]
    %v150 = vld [vmem:[#allocation5 + $0x20] sm:$0xff]
    %v151 = vld [vmem:[#allocation5 + $0x28] sm:$0xff]
    %v152 = vld [vmem:[#allocation5 + $0x30] sm:$0xff]
    %v153 = vld [vmem:[#allocation5 + $0x38] sm:$0xff]
    %v154 = vld [vmem:[#allocation5 + $0x40] sm:$0xff]
    %v155 = vld [vmem:[#allocation5 + $0x48] sm:$0xff]
    %v156 = vld [vmem:[#allocation5 + $0x50] sm:$0xff]
    %v157 = vld [vmem:[#allocation5 + $0x58] sm:$0xff]
    %v158 = vld [vmem:[#allocation5 + $0x60] sm:$0xff]
    %v159 = vld [vmem:[#allocation5 + $0x68] sm:$0xff]
    %v160 = vld [vmem:[#allocation5 + $0x70] sm:$0xff]
    %v161 = vld [vmem:[#allocation5 + $0x78] sm:$0xff]
    %v162 = vld [vmem:[#allocation5 + $0x80] sm:$0xff]
    %v163 = vld [vmem:[#allocation5 + $0x88] sm:$0xff]
    %v164 = vld [vmem:[#allocation5 + $0x90] sm:$0xff]
    %v165 = vld [vmem:[#allocation5 + $0x98] sm:$0xff]
    %v166 = vld [vmem:[#allocation5 + $0xa0] sm:$0xff]
    %v167 = vld [vmem:[#allocation5 + $0xa8] sm:$0xff]
    %v168 = vld [vmem:[#allocation5 + $0xb0] sm:$0xff]
    %v169 = vld [vmem:[#allocation5 + $0xb8] sm:$0xff]
    %v170 = vld [vmem:[#allocation5 + $0xc0] sm:$0xff]
    %v171 = vld [vmem:[#allocation5 + $0xc8] sm:$0xff]
    %v172 = vld [vmem:[#allocation5 + $0xd0] sm:$0xff]
    %v173 = vld [vmem:[#allocation5 + $0xd8] sm:$0xff]
    %v174 = vld [vmem:[#allocation5 + $0xe0] sm:$0xff]
    %v175 = vld [vmem:[#allocation5 + $0xe8] sm:$0xff]
    %v176 = vld [vmem:[#allocation5 + $0xf0] sm:$0xff]
    %v177 = vld [vmem:[#allocation5 + $0xf8] sm:$0xff]
    %v178 = vld [vmem:[#allocation5 + $0x100] sm:$0xff]
    %v179 = vld [vmem:[#allocation5 + $0x108] sm:$0xff]
    %v180 = vld [vmem:[#allocation5 + $0x110] sm:$0xff]
    %v181 = vld [vmem:[#allocation5 + $0x118] sm:$0xff]
    %v182 = vld [vmem:[#allocation5 + $0x120] sm:$0xff]
    %v183 = vld [vmem:[#allocation5 + $0x128] sm:$0xff]
    %v184 = vld [vmem:[#allocation5 + $0x130] sm:$0xff]
    %v185 = vld [vmem:[#allocation5 + $0x138] sm:$0xff]
    %v186 = vld [vmem:[#allocation5 + $0x140] sm:$0xff]
    %v187 = vld [vmem:[#allocation5 + $0x148] sm:$0xff]
    %v188 = vld [vmem:[#allocation5 + $0x150] sm:$0xff]
    %v189 = vld [vmem:[#allocation5 + $0x158] sm:$0xff]
    %v190 = vld [vmem:[#allocation5 + $0x160] sm:$0xff]
    %v191 = vld [vmem:[#allocation5 + $0x168] sm:$0xff]
    %v192 = vld [vmem:[#allocation5 + $0x170] sm:$0xff]
    %v193 = vld [vmem:[#allocation5 + $0x178] sm:$0xff]
    %v194 = vld [vmem:[#allocation5 + $0x180] sm:$0xff]
    %v195 = vld [vmem:[#allocation5 + $0x188] sm:$0xff]
    %v196 = vld [vmem:[#allocation5 + $0x190] sm:$0xff]
    %v197 = vld [vmem:[#allocation5 + $0x198] sm:$0xff]
    %v198 = vld [vmem:[#allocation5 + $0x1a0] sm:$0xff]
    %v199 = vld [vmem:[#allocation5 + $0x1a8] sm:$0xff]
    %v200 = vld [vmem:[#allocation5 + $0x1b0] sm:$0xff]
    %v201 = vld [vmem:[#allocation5 + $0x1b8] sm:$0xff]
    %v202 = vld [vmem:[#allocation5 + $0x1c0] sm:$0xff]
    %v203 = vld [vmem:[#allocation5 + $0x1c8] sm:$0xff]
    %v204 = vld [vmem:[#allocation5 + $0x1d0] sm:$0xff]
    %v205 = vld [vmem:[#allocation5 + $0x1d8] sm:$0xff]
    %v206 = vld [vmem:[#allocation5 + $0x1e0] sm:$0xff]
    %v207 = vld [vmem:[#allocation5 + $0x1e8] sm:$0xff]
    %v208 = vld [vmem:[#allocation5 + $0x1f0] sm:$0xff]
    %v209 = vld [vmem:[#allocation5 + $0x1f8] sm:$0xff]
    %v210 = vld [vmem:[#allocation5 + $0x200] sm:$0xff]
    %v211 = vld [vmem:[#allocation5 + $0x208] sm:$0xff]
    %v212 = vld [vmem:[#allocation5 + $0x210] sm:$0xff]
    %v213 = vld [vmem:[#allocation5 + $0x218] sm:$0xff]
    %v214 = vld [vmem:[#allocation5 + $0x220] sm:$0xff]
    %v215 = vld [vmem:[#allocation5 + $0x228] sm:$0xff]
    %v216 = vld [vmem:[#allocation5 + $0x230] sm:$0xff]
    %v217 = vld [vmem:[#allocation5 + $0x238] sm:$0xff]
    %v218 = vld [vmem:[#allocation5 + $0x240] sm:$0xff]
    %v219 = vld [vmem:[#allocation5 + $0x248] sm:$0xff]
    %v220 = vld [vmem:[#allocation5 + $0x250] sm:$0xff]
    %v221 = vld [vmem:[#allocation5 + $0x258] sm:$0xff]
    %v222 = vld [vmem:[#allocation5 + $0x260] sm:$0xff]
    %v223 = vld [vmem:[#allocation5 + $0x268] sm:$0xff]
    %v224 = vld [vmem:[#allocation5 + $0x270] sm:$0xff]
    %v225 = vld [vmem:[#allocation5 + $0x278] sm:$0xff]
    %v226 = vld [vmem:[#allocation5 + $0x280] sm:$0xff]
    %v227 = vld [vmem:[#allocation5 + $0x288] sm:$0xff]
    %v228 = vld [vmem:[#allocation5 + $0x290] sm:$0xff]
    %v229 = vld [vmem:[#allocation5 + $0x298] sm:$0xff]
    %v230 = vld [vmem:[#allocation5 + $0x2a0] sm:$0xff]
    %v231 = vld [vmem:[#allocation5 + $0x2a8] sm:$0xff]
    %v232 = vld [vmem:[#allocation5 + $0x2b0] sm:$0xff]
    %v233 = vld [vmem:[#allocation5 + $0x2b8] sm:$0xff]
    %v234 = vld [vmem:[#allocation5 + $0x2c0] sm:$0xff]
    %v235 = vld [vmem:[#allocation5 + $0x2c8] sm:$0xff]
    %v236 = vld [vmem:[#allocation5 + $0x2d0] sm:$0xff]
    %v237 = vld [vmem:[#allocation5 + $0x2d8] sm:$0xff]
    %v238 = vld [vmem:[#allocation5 + $0x2e0] sm:$0xff]
    %v239 = vld [vmem:[#allocation5 + $0x2e8] sm:$0xff]
    %v240 = vld [vmem:[#allocation5 + $0x2f0] sm:$0xff]
    %v241 = vld [vmem:[#allocation5 + $0x2f8] sm:$0xff]
    %v242 = vld [vmem:[#allocation5 + $0x300] sm:$0xff]
    %v243 = vld [vmem:[#allocation5 + $0x308] sm:$0xff]
    %v244 = vld [vmem:[#allocation5 + $0x310] sm:$0xff]
    %v245 = vld [vmem:[#allocation5 + $0x318] sm:$0xff]
    %v246 = vld [vmem:[#allocation5 + $0x320] sm:$0xff]
    %v247 = vld [vmem:[#allocation5 + $0x328] sm:$0xff]
    %v248 = vld [vmem:[#allocation5 + $0x330] sm:$0xff]
    %v249 = vld [vmem:[#allocation5 + $0x338] sm:$0xff]
    %v250 = vld [vmem:[#allocation5 + $0x340] sm:$0xff]
    %v251 = vld [vmem:[#allocation5 + $0x348] sm:$0xff]
    %v252 = vld [vmem:[#allocation5 + $0x350] sm:$0xff]
    %v253 = vld [vmem:[#allocation5 + $0x358] sm:$0xff]
    %v254 = vld [vmem:[#allocation5 + $0x360] sm:$0xff]
    %v255 = vld [vmem:[#allocation5 + $0x368] sm:$0xff]
    %v256 = vld [vmem:[#allocation5 + $0x370] sm:$0xff]
    %v257 = vld [vmem:[#allocation5 + $0x378] sm:$0xff]
    %v258 = vld [vmem:[#allocation5 + $0x380] sm:$0xff]
    %v259 = vld [vmem:[#allocation5 + $0x388] sm:$0xff]
    %v260 = vld [vmem:[#allocation5 + $0x390] sm:$0xff]
    %v261 = vld [vmem:[#allocation5 + $0x398] sm:$0xff]
    %v262 = vld [vmem:[#allocation5 + $0x3a0] sm:$0xff]
    %v263 = vld [vmem:[#allocation5 + $0x3a8] sm:$0xff]
    %v264 = vld [vmem:[#allocation5 + $0x3b0] sm:$0xff]
    %v265 = vld [vmem:[#allocation5 + $0x3b8] sm:$0xff]
    %v266 = vld [vmem:[#allocation5 + $0x3c0] sm:$0xff]
    %v267 = vld [vmem:[#allocation5 + $0x3c8] sm:$0xff]
    %v268 = vld [vmem:[#allocation5 + $0x3d0] sm:$0xff]
    %v269 = vld [vmem:[#allocation5 + $0x3d8] sm:$0xff]
    %v270 = vld [vmem:[#allocation5 + $0x3e0] sm:$0xff]
    %v271 = vld [vmem:[#allocation5 + $0x3e8] sm:$0xff]
    %v272 = vld [vmem:[#allocation5 + $0x3f0] sm:$0xff]
    %v273 = vld [vmem:[#allocation5 + $0x3f8] sm:$0xff]
    %v274 = vld [vmem:[#allocation7] sm:$0x3]
    %v276 = vperm.slane %v274, 0
    %v277 = vperm.slane %v274, 1
    %v408 = vunpack.c.l.b16 %v146
    %v409 = vunpack.c.h.b16 %v146
    %v410 = vunpack.c.l.b16 %v147
    %v411 = vunpack.c.h.b16 %v147
    %v412 = vunpack.c.l.b16 %v148
    %v413 = vunpack.c.h.b16 %v148
    %v414 = vunpack.c.l.b16 %v149
    %v415 = vunpack.c.h.b16 %v149
    %v416 = vunpack.c.l.b16 %v150
    %v417 = vunpack.c.h.b16 %v150
    %v418 = vunpack.c.l.b16 %v151
    %v419 = vunpack.c.h.b16 %v151
    %v420 = vunpack.c.l.b16 %v152
    %v421 = vunpack.c.h.b16 %v152
    %v422 = vunpack.c.l.b16 %v153
    %v423 = vunpack.c.h.b16 %v153
    %v424 = vunpack.c.l.b16 %v154
    %v425 = vunpack.c.h.b16 %v154
    %v426 = vunpack.c.l.b16 %v155
    %v427 = vunpack.c.h.b16 %v155
    %v428 = vunpack.c.l.b16 %v156
    %v429 = vunpack.c.h.b16 %v156
    %v430 = vunpack.c.l.b16 %v157
    %v431 = vunpack.c.h.b16 %v157
    %v432 = vunpack.c.l.b16 %v158
    %v433 = vunpack.c.h.b16 %v158
    %v434 = vunpack.c.l.b16 %v159
    %v435 = vunpack.c.h.b16 %v159
    %v436 = vunpack.c.l.b16 %v160
    %v437 = vunpack.c.h.b16 %v160
    %v438 = vunpack.c.l.b16 %v161
    %v439 = vunpack.c.h.b16 %v161
    %v440 = vunpack.c.l.b16 %v162
    %v441 = vunpack.c.h.b16 %v162
    %v442 = vunpack.c.l.b16 %v163
    %v443 = vunpack.c.h.b16 %v163
    %v444 = vunpack.c.l.b16 %v164
    %v445 = vunpack.c.h.b16 %v164
    %v446 = vunpack.c.l.b16 %v165
    %v447 = vunpack.c.h.b16 %v165
    %v448 = vunpack.c.l.b16 %v166
    %v449 = vunpack.c.h.b16 %v166
    %v450 = vunpack.c.l.b16 %v167
    %v451 = vunpack.c.h.b16 %v167
    %v452 = vunpack.c.l.b16 %v168
    %v453 = vunpack.c.h.b16 %v168
    %v454 = vunpack.c.l.b16 %v169
    %v455 = vunpack.c.h.b16 %v169
    %v456 = vunpack.c.l.b16 %v170
    %v457 = vunpack.c.h.b16 %v170
    %v458 = vunpack.c.l.b16 %v171
    %v459 = vunpack.c.h.b16 %v171
    %v460 = vunpack.c.l.b16 %v172
    %v461 = vunpack.c.h.b16 %v172
    %v462 = vunpack.c.l.b16 %v173
    %v463 = vunpack.c.h.b16 %v173
    %v464 = vunpack.c.l.b16 %v174
    %v465 = vunpack.c.h.b16 %v174
    %v466 = vunpack.c.l.b16 %v175
    %v467 = vunpack.c.h.b16 %v175
    %v468 = vunpack.c.l.b16 %v176
    %v469 = vunpack.c.h.b16 %v176
    %v470 = vunpack.c.l.b16 %v177
    %v471 = vunpack.c.h.b16 %v177
    %v472 = vunpack.c.l.b16 %v178
    %v473 = vunpack.c.h.b16 %v178
    %v474 = vunpack.c.l.b16 %v179
    %v475 = vunpack.c.h.b16 %v179
    %v476 = vunpack.c.l.b16 %v180
    %v477 = vunpack.c.h.b16 %v180
    %v478 = vunpack.c.l.b16 %v181
    %v479 = vunpack.c.h.b16 %v181
    %v480 = vunpack.c.l.b16 %v182
    %v481 = vunpack.c.h.b16 %v182
    %v482 = vunpack.c.l.b16 %v183
    %v483 = vunpack.c.h.b16 %v183
    %v484 = vunpack.c.l.b16 %v184
    %v485 = vunpack.c.h.b16 %v184
    %v486 = vunpack.c.l.b16 %v185
    %v487 = vunpack.c.h.b16 %v185
    %v488 = vunpack.c.l.b16 %v186
    %v489 = vunpack.c.h.b16 %v186
    %v490 = vunpack.c.l.b16 %v187
    %v491 = vunpack.c.h.b16 %v187
    %v492 = vunpack.c.l.b16 %v188
    %v493 = vunpack.c.h.b16 %v188
    %v494 = vunpack.c.l.b16 %v189
    %v495 = vunpack.c.h.b16 %v189
    %v496 = vunpack.c.l.b16 %v190
    %v497 = vunpack.c.h.b16 %v190
    %v498 = vunpack.c.l.b16 %v191
    %v499 = vunpack.c.h.b16 %v191
    %v500 = vunpack.c.l.b16 %v192
    %v501 = vunpack.c.h.b16 %v192
    %v502 = vunpack.c.l.b16 %v193
    %v503 = vunpack.c.h.b16 %v193
    %v504 = vunpack.c.l.b16 %v194
    %v505 = vunpack.c.h.b16 %v194
    %v506 = vunpack.c.l.b16 %v195
    %v507 = vunpack.c.h.b16 %v195
    %v508 = vunpack.c.l.b16 %v196
    %v509 = vunpack.c.h.b16 %v196
    %v510 = vunpack.c.l.b16 %v197
    %v511 = vunpack.c.h.b16 %v197
    %v512 = vunpack.c.l.b16 %v198
    %v513 = vunpack.c.h.b16 %v198
    %v514 = vunpack.c.l.b16 %v199
    %v515 = vunpack.c.h.b16 %v199
    %v516 = vunpack.c.l.b16 %v200
    %v517 = vunpack.c.h.b16 %v200
    %v518 = vunpack.c.l.b16 %v201
    %v519 = vunpack.c.h.b16 %v201
    %v520 = vunpack.c.l.b16 %v202
    %v521 = vunpack.c.h.b16 %v202
    %v522 = vunpack.c.l.b16 %v203
    %v523 = vunpack.c.h.b16 %v203
    %v524 = vunpack.c.l.b16 %v204
    %v525 = vunpack.c.h.b16 %v204
    %v526 = vunpack.c.l.b16 %v205
    %v527 = vunpack.c.h.b16 %v205
    %v528 = vunpack.c.l.b16 %v206
    %v529 = vunpack.c.h.b16 %v206
    %v530 = vunpack.c.l.b16 %v207
    %v531 = vunpack.c.h.b16 %v207
    %v532 = vunpack.c.l.b16 %v208
    %v533 = vunpack.c.h.b16 %v208
    %v534 = vunpack.c.l.b16 %v209
    %v535 = vunpack.c.h.b16 %v209
    %v536 = vunpack.c.l.b16 %v210
    %v537 = vunpack.c.h.b16 %v210
    %v538 = vunpack.c.l.b16 %v211
    %v539 = vunpack.c.h.b16 %v211
    %v540 = vunpack.c.l.b16 %v212
    %v541 = vunpack.c.h.b16 %v212
    %v542 = vunpack.c.l.b16 %v213
    %v543 = vunpack.c.h.b16 %v213
    %v544 = vunpack.c.l.b16 %v214
    %v545 = vunpack.c.h.b16 %v214
    %v546 = vunpack.c.l.b16 %v215
    %v547 = vunpack.c.h.b16 %v215
    %v548 = vunpack.c.l.b16 %v216
    %v549 = vunpack.c.h.b16 %v216
    %v550 = vunpack.c.l.b16 %v217
    %v551 = vunpack.c.h.b16 %v217
    %v552 = vunpack.c.l.b16 %v218
    %v553 = vunpack.c.h.b16 %v218
    %v554 = vunpack.c.l.b16 %v219
    %v555 = vunpack.c.h.b16 %v219
    %v556 = vunpack.c.l.b16 %v220
    %v557 = vunpack.c.h.b16 %v220
    %v558 = vunpack.c.l.b16 %v221
    %v559 = vunpack.c.h.b16 %v221
    %v560 = vunpack.c.l.b16 %v222
    %v561 = vunpack.c.h.b16 %v222
    %v562 = vunpack.c.l.b16 %v223
    %v563 = vunpack.c.h.b16 %v223
    %v564 = vunpack.c.l.b16 %v224
    %v565 = vunpack.c.h.b16 %v224
    %v566 = vunpack.c.l.b16 %v225
    %v567 = vunpack.c.h.b16 %v225
    %v568 = vunpack.c.l.b16 %v226
    %v569 = vunpack.c.h.b16 %v226
    %v570 = vunpack.c.l.b16 %v227
    %v571 = vunpack.c.h.b16 %v227
    %v572 = vunpack.c.l.b16 %v228
    %v573 = vunpack.c.h.b16 %v228
    %v574 = vunpack.c.l.b16 %v229
    %v575 = vunpack.c.h.b16 %v229
    %v576 = vunpack.c.l.b16 %v230
    %v577 = vunpack.c.h.b16 %v230
    %v578 = vunpack.c.l.b16 %v231
    %v579 = vunpack.c.h.b16 %v231
    %v580 = vunpack.c.l.b16 %v232
    %v581 = vunpack.c.h.b16 %v232
    %v582 = vunpack.c.l.b16 %v233
    %v583 = vunpack.c.h.b16 %v233
    %v584 = vunpack.c.l.b16 %v234
    %v585 = vunpack.c.h.b16 %v234
    %v586 = vunpack.c.l.b16 %v235
    %v587 = vunpack.c.h.b16 %v235
    %v588 = vunpack.c.l.b16 %v236
    %v589 = vunpack.c.h.b16 %v236
    %v590 = vunpack.c.l.b16 %v237
    %v591 = vunpack.c.h.b16 %v237
    %v592 = vunpack.c.l.b16 %v238
    %v593 = vunpack.c.h.b16 %v238
    %v594 = vunpack.c.l.b16 %v239
    %v595 = vunpack.c.h.b16 %v239
    %v596 = vunpack.c.l.b16 %v240
    %v597 = vunpack.c.h.b16 %v240
    %v598 = vunpack.c.l.b16 %v241
    %v599 = vunpack.c.h.b16 %v241
    %v600 = vunpack.c.l.b16 %v242
    %v601 = vunpack.c.h.b16 %v242
    %v602 = vunpack.c.l.b16 %v243
    %v603 = vunpack.c.h.b16 %v243
    %v604 = vunpack.c.l.b16 %v244
    %v605 = vunpack.c.h.b16 %v244
    %v606 = vunpack.c.l.b16 %v245
    %v607 = vunpack.c.h.b16 %v245
    %v608 = vunpack.c.l.b16 %v246
    %v609 = vunpack.c.h.b16 %v246
    %v610 = vunpack.c.l.b16 %v247
    %v611 = vunpack.c.h.b16 %v247
    %v612 = vunpack.c.l.b16 %v248
    %v613 = vunpack.c.h.b16 %v248
    %v614 = vunpack.c.l.b16 %v249
    %v615 = vunpack.c.h.b16 %v249
    %v616 = vunpack.c.l.b16 %v250
    %v617 = vunpack.c.h.b16 %v250
    %v618 = vunpack.c.l.b16 %v251
    %v619 = vunpack.c.h.b16 %v251
    %v620 = vunpack.c.l.b16 %v252
    %v621 = vunpack.c.h.b16 %v252
    %v622 = vunpack.c.l.b16 %v253
    %v623 = vunpack.c.h.b16 %v253
    %v624 = vunpack.c.l.b16 %v254
    %v625 = vunpack.c.h.b16 %v254
    %v626 = vunpack.c.l.b16 %v255
    %v627 = vunpack.c.h.b16 %v255
    %v628 = vunpack.c.l.b16 %v256
    %v629 = vunpack.c.h.b16 %v256
    %v630 = vunpack.c.l.b16 %v257
    %v631 = vunpack.c.h.b16 %v257
    %v632 = vunpack.c.l.b16 %v258
    %v633 = vunpack.c.h.b16 %v258
    %v634 = vunpack.c.l.b16 %v259
    %v635 = vunpack.c.h.b16 %v259
    %v636 = vunpack.c.l.b16 %v260
    %v637 = vunpack.c.h.b16 %v260
    %v638 = vunpack.c.l.b16 %v261
    %v639 = vunpack.c.h.b16 %v261
    %v640 = vunpack.c.l.b16 %v262
    %v641 = vunpack.c.h.b16 %v262
    %v642 = vunpack.c.l.b16 %v263
    %v643 = vunpack.c.h.b16 %v263
    %v644 = vunpack.c.l.b16 %v264
    %v645 = vunpack.c.h.b16 %v264
    %v646 = vunpack.c.l.b16 %v265
    %v647 = vunpack.c.h.b16 %v265
    %v648 = vunpack.c.l.b16 %v266
    %v649 = vunpack.c.h.b16 %v266
    %v650 = vunpack.c.l.b16 %v267
    %v651 = vunpack.c.h.b16 %v267
    %v652 = vunpack.c.l.b16 %v268
    %v653 = vunpack.c.h.b16 %v268
    %v654 = vunpack.c.l.b16 %v269
    %v655 = vunpack.c.h.b16 %v269
    %v656 = vunpack.c.l.b16 %v270
    %v657 = vunpack.c.h.b16 %v270
    %v658 = vunpack.c.l.b16 %v271
    %v659 = vunpack.c.h.b16 %v271
    %v660 = vunpack.c.l.b16 %v272
    %v661 = vunpack.c.h.b16 %v272
    %v662 = vunpack.c.l.b16 %v273
    %v663 = vunpack.c.h.b16 %v273
    %v664 = vpack.c.b16 %v410, %v408
    %v665 = vpack.c.b16 %v411, %v409
    %v666 = vpack.c.b16 %v414, %v412
    %v667 = vpack.c.b16 %v415, %v413
    %v668 = vpack.c.b16 %v418, %v416
    %v669 = vpack.c.b16 %v419, %v417
    %v670 = vpack.c.b16 %v422, %v420
    %v671 = vpack.c.b16 %v423, %v421
    %v672 = vpack.c.b16 %v426, %v424
    %v673 = vpack.c.b16 %v427, %v425
    %v674 = vpack.c.b16 %v430, %v428
    %v675 = vpack.c.b16 %v431, %v429
    %v676 = vpack.c.b16 %v434, %v432
    %v677 = vpack.c.b16 %v435, %v433
    %v678 = vpack.c.b16 %v438, %v436
    %v679 = vpack.c.b16 %v439, %v437
    %v680 = vpack.c.b16 %v442, %v440
    %v681 = vpack.c.b16 %v443, %v441
    %v682 = vpack.c.b16 %v446, %v444
    %v683 = vpack.c.b16 %v447, %v445
    %v684 = vpack.c.b16 %v450, %v448
    %v685 = vpack.c.b16 %v451, %v449
    %v686 = vpack.c.b16 %v454, %v452
    %v687 = vpack.c.b16 %v455, %v453
    %v688 = vpack.c.b16 %v458, %v456
    %v689 = vpack.c.b16 %v459, %v457
    %v690 = vpack.c.b16 %v462, %v460
    %v691 = vpack.c.b16 %v463, %v461
    %v692 = vpack.c.b16 %v466, %v464
    %v693 = vpack.c.b16 %v467, %v465
    %v694 = vpack.c.b16 %v470, %v468
    %v695 = vpack.c.b16 %v471, %v469
    %v696 = vpack.c.b16 %v474, %v472
    %v697 = vpack.c.b16 %v475, %v473
    %v698 = vpack.c.b16 %v478, %v476
    %v699 = vpack.c.b16 %v479, %v477
    %v700 = vpack.c.b16 %v482, %v480
    %v701 = vpack.c.b16 %v483, %v481
    %v702 = vpack.c.b16 %v486, %v484
    %v703 = vpack.c.b16 %v487, %v485
    %v704 = vpack.c.b16 %v490, %v488
    %v705 = vpack.c.b16 %v491, %v489
    %v706 = vpack.c.b16 %v494, %v492
    %v707 = vpack.c.b16 %v495, %v493
    %v708 = vpack.c.b16 %v498, %v496
    %v709 = vpack.c.b16 %v499, %v497
    %v710 = vpack.c.b16 %v502, %v500
    %v711 = vpack.c.b16 %v503, %v501
    %v712 = vpack.c.b16 %v506, %v504
    %v713 = vpack.c.b16 %v507, %v505
    %v714 = vpack.c.b16 %v510, %v508
    %v715 = vpack.c.b16 %v511, %v509
    %v716 = vpack.c.b16 %v514, %v512
    %v717 = vpack.c.b16 %v515, %v513
    %v718 = vpack.c.b16 %v518, %v516
    %v719 = vpack.c.b16 %v519, %v517
    %v720 = vpack.c.b16 %v522, %v520
    %v721 = vpack.c.b16 %v523, %v521
    %v722 = vpack.c.b16 %v526, %v524
    %v723 = vpack.c.b16 %v527, %v525
    %v724 = vpack.c.b16 %v530, %v528
    %v725 = vpack.c.b16 %v531, %v529
    %v726 = vpack.c.b16 %v534, %v532
    %v727 = vpack.c.b16 %v535, %v533
    %v728 = vpack.c.b16 %v538, %v536
    %v729 = vpack.c.b16 %v539, %v537
    %v730 = vpack.c.b16 %v542, %v540
    %v731 = vpack.c.b16 %v543, %v541
    %v732 = vpack.c.b16 %v546, %v544
    %v733 = vpack.c.b16 %v547, %v545
    %v734 = vpack.c.b16 %v550, %v548
    %v735 = vpack.c.b16 %v551, %v549
    %v736 = vpack.c.b16 %v554, %v552
    %v737 = vpack.c.b16 %v555, %v553
    %v738 = vpack.c.b16 %v558, %v556
    %v739 = vpack.c.b16 %v559, %v557
    %v740 = vpack.c.b16 %v562, %v560
    %v741 = vpack.c.b16 %v563, %v561
    %v742 = vpack.c.b16 %v566, %v564
    %v743 = vpack.c.b16 %v567, %v565
    %v744 = vpack.c.b16 %v570, %v568
    %v745 = vpack.c.b16 %v571, %v569
    %v746 = vpack.c.b16 %v574, %v572
    %v747 = vpack.c.b16 %v575, %v573
    %v748 = vpack.c.b16 %v578, %v576
    %v749 = vpack.c.b16 %v579, %v577
    %v750 = vpack.c.b16 %v582, %v580
    %v751 = vpack.c.b16 %v583, %v581
    %v752 = vpack.c.b16 %v586, %v584
    %v753 = vpack.c.b16 %v587, %v585
    %v754 = vpack.c.b16 %v590, %v588
    %v755 = vpack.c.b16 %v591, %v589
    %v756 = vpack.c.b16 %v594, %v592
    %v757 = vpack.c.b16 %v595, %v593
    %v758 = vpack.c.b16 %v598, %v596
    %v759 = vpack.c.b16 %v599, %v597
    %v760 = vpack.c.b16 %v602, %v600
    %v761 = vpack.c.b16 %v603, %v601
    %v762 = vpack.c.b16 %v606, %v604
    %v763 = vpack.c.b16 %v607, %v605
    %v764 = vpack.c.b16 %v610, %v608
    %v765 = vpack.c.b16 %v611, %v609
    %v766 = vpack.c.b16 %v614, %v612
    %v767 = vpack.c.b16 %v615, %v613
    %v768 = vpack.c.b16 %v618, %v616
    %v769 = vpack.c.b16 %v619, %v617
    %v770 = vpack.c.b16 %v622, %v620
    %v771 = vpack.c.b16 %v623, %v621
    %v772 = vpack.c.b16 %v626, %v624
    %v773 = vpack.c.b16 %v627, %v625
    %v774 = vpack.c.b16 %v630, %v628
    %v775 = vpack.c.b16 %v631, %v629
    %v776 = vpack.c.b16 %v634, %v632
    %v777 = vpack.c.b16 %v635, %v633
    %v778 = vpack.c.b16 %v638, %v636
    %v779 = vpack.c.b16 %v639, %v637
    %v780 = vpack.c.b16 %v642, %v640
    %v781 = vpack.c.b16 %v643, %v641
    %v782 = vpack.c.b16 %v646, %v644
    %v783 = vpack.c.b16 %v647, %v645
    %v784 = vpack.c.b16 %v650, %v648
    %v785 = vpack.c.b16 %v651, %v649
    %v786 = vpack.c.b16 %v654, %v652
    %v787 = vpack.c.b16 %v655, %v653
    %v788 = vpack.c.b16 %v658, %v656
    %v789 = vpack.c.b16 %v659, %v657
    %v790 = vpack.c.b16 %v662, %v660
    %v791 = vpack.c.b16 %v663, %v661
    %920 = vmatpush.bf16.msra.mxu0 %v678
    %921 = vmatpush.bf16.msra.mxu0 %v676
    %922 = vmatpush.bf16.msra.mxu0 %v674
    %923 = vmatpush.bf16.msra.mxu0 %v672
    %924 = vmatpush.bf16.msra.mxu0 %v670
    %925 = vmatpush.bf16.msra.mxu0 %v668
    %926 = vmatpush.bf16.msra.mxu0 %v666
    %927 = vmatpush.bf16.msra.mxu0 %v664
    %928 = vmatmul.bf16.gmra.mxu0 %v138
    %v929 = vpop.f32.mrf.mxu0
    %v930 = vadd.f32 %v276, %v929
    %v931 = vpop.f32.mrf.mxu0
    %932 = vdwg.mxu0
    %933 = vmatpush.bf16.msra.mxu0 %v694
    %934 = vmatpush.bf16.msra.mxu0 %v692
    %935 = vmatpush.bf16.msra.mxu0 %v690
    %936 = vmatpush.bf16.msra.mxu0 %v688
    %937 = vmatpush.bf16.msra.mxu0 %v686
    %938 = vmatpush.bf16.msra.mxu0 %v684
    %939 = vmatpush.bf16.msra.mxu0 %v682
    %940 = vmatpush.bf16.msra.mxu0 %v680
    %941 = vmatmul.bf16.gmra.mxu0 %v139
    %v942 = vpop.f32.mrf.mxu0
    %v943 = vadd.f32 %v930, %v942
    %v944 = vpop.f32.mrf.mxu0
    %945 = vdwg.mxu0
    %946 = vmatpush.bf16.msra.mxu0 %v710
    %947 = vmatpush.bf16.msra.mxu0 %v708
    %948 = vmatpush.bf16.msra.mxu0 %v706
    %949 = vmatpush.bf16.msra.mxu0 %v704
    %950 = vmatpush.bf16.msra.mxu0 %v702
    %951 = vmatpush.bf16.msra.mxu0 %v700
    %952 = vmatpush.bf16.msra.mxu0 %v698
    %953 = vmatpush.bf16.msra.mxu0 %v696
    %954 = vmatmul.bf16.gmra.mxu0 %v140
    %v955 = vpop.f32.mrf.mxu0
    %v956 = vadd.f32 %v943, %v955
    %v957 = vpop.f32.mrf.mxu0
    %958 = vdwg.mxu0
    %959 = vmatpush.bf16.msra.mxu0 %v726
    %960 = vmatpush.bf16.msra.mxu0 %v724
    %961 = vmatpush.bf16.msra.mxu0 %v722
    %962 = vmatpush.bf16.msra.mxu0 %v720
    %963 = vmatpush.bf16.msra.mxu0 %v718
    %964 = vmatpush.bf16.msra.mxu0 %v716
    %965 = vmatpush.bf16.msra.mxu0 %v714
    %966 = vmatpush.bf16.msra.mxu0 %v712
    %967 = vmatmul.bf16.gmra.mxu0 %v141
    %v968 = vpop.f32.mrf.mxu0
    %v969 = vadd.f32 %v956, %v968
    %v970 = vpop.f32.mrf.mxu0
    %971 = vdwg.mxu0
    %972 = vmatpush.bf16.msra.mxu0 %v742
    %973 = vmatpush.bf16.msra.mxu0 %v740
    %974 = vmatpush.bf16.msra.mxu0 %v738
    %975 = vmatpush.bf16.msra.mxu0 %v736
    %976 = vmatpush.bf16.msra.mxu0 %v734
    %977 = vmatpush.bf16.msra.mxu0 %v732
    %978 = vmatpush.bf16.msra.mxu0 %v730
    %979 = vmatpush.bf16.msra.mxu0 %v728
    %980 = vmatmul.bf16.gmra.mxu0 %v142
    %v981 = vpop.f32.mrf.mxu0
    %v982 = vadd.f32 %v969, %v981
    %v983 = vpop.f32.mrf.mxu0
    %984 = vdwg.mxu0
    %985 = vmatpush.bf16.msra.mxu0 %v758
    %986 = vmatpush.bf16.msra.mxu0 %v756
    %987 = vmatpush.bf16.msra.mxu0 %v754
    %988 = vmatpush.bf16.msra.mxu0 %v752
    %989 = vmatpush.bf16.msra.mxu0 %v750
    %990 = vmatpush.bf16.msra.mxu0 %v748
    %991 = vmatpush.bf16.msra.mxu0 %v746
    %992 = vmatpush.bf16.msra.mxu0 %v744
    %993 = vmatmul.bf16.gmra.mxu0 %v143
    %v994 = vpop.f32.mrf.mxu0
    %v995 = vadd.f32 %v982, %v994
    %v996 = vpop.f32.mrf.mxu0
    %997 = vdwg.mxu0
    %998 = vmatpush.bf16.msra.mxu0 %v774
    %999 = vmatpush.bf16.msra.mxu0 %v772
    %1000 = vmatpush.bf16.msra.mxu0 %v770
    %1001 = vmatpush.bf16.msra.mxu0 %v768
    %1002 = vmatpush.bf16.msra.mxu0 %v766
    %1003 = vmatpush.bf16.msra.mxu0 %v764
    %1004 = vmatpush.bf16.msra.mxu0 %v762
    %1005 = vmatpush.bf16.msra.mxu0 %v760
    %1006 = vmatmul.bf16.gmra.mxu0 %v144
    %v1007 = vpop.f32.mrf.mxu0
    %v1008 = vadd.f32 %v995, %v1007
    %v1009 = vpop.f32.mrf.mxu0
    %1010 = vdwg.mxu0
    %1011 = vmatpush.bf16.msra.mxu0 %v790
    %1012 = vmatpush.bf16.msra.mxu0 %v788
    %1013 = vmatpush.bf16.msra.mxu0 %v786
    %1014 = vmatpush.bf16.msra.mxu0 %v784
    %1015 = vmatpush.bf16.msra.mxu0 %v782
    %1016 = vmatpush.bf16.msra.mxu0 %v780
    %1017 = vmatpush.bf16.msra.mxu0 %v778
    %1018 = vmatpush.bf16.msra.mxu0 %v776
    %1019 = vmatmul.bf16.gmra.mxu0 %v145
    %v1020 = vpop.f32.mrf.mxu0
    %v1021 = vadd.f32 %v1008, %v1020
    %v1022 = vpop.f32.mrf.mxu0
    %1023 = vdwg.mxu0
    %1024 = vmatpush.bf16.msra.mxu0 %v679
    %1025 = vmatpush.bf16.msra.mxu0 %v677
    %1026 = vmatpush.bf16.msra.mxu0 %v675
    %1027 = vmatpush.bf16.msra.mxu0 %v673
    %1028 = vmatpush.bf16.msra.mxu0 %v671
    %1029 = vmatpush.bf16.msra.mxu0 %v669
    %1030 = vmatpush.bf16.msra.mxu0 %v667
    %1031 = vmatpush.bf16.msra.mxu0 %v665
    %1032 = vmatmul.bf16.gmra.mxu0 %v138
    %v1033 = vpop.f32.mrf.mxu0
    %v1034 = vadd.f32 %v277, %v1033
    %v1035 = vpop.f32.mrf.mxu0
    %1036 = vdwg.mxu0
    %1037 = vmatpush.bf16.msra.mxu0 %v695
    %1038 = vmatpush.bf16.msra.mxu0 %v693
    %1039 = vmatpush.bf16.msra.mxu0 %v691
    %1040 = vmatpush.bf16.msra.mxu0 %v689
    %1041 = vmatpush.bf16.msra.mxu0 %v687
    %1042 = vmatpush.bf16.msra.mxu0 %v685
    %1043 = vmatpush.bf16.msra.mxu0 %v683
    %1044 = vmatpush.bf16.msra.mxu0 %v681
    %1045 = vmatmul.bf16.gmra.mxu0 %v139
    %v1046 = vpop.f32.mrf.mxu0
    %v1047 = vadd.f32 %v1034, %v1046
    %v1048 = vpop.f32.mrf.mxu0
    %1049 = vdwg.mxu0
    %1050 = vmatpush.bf16.msra.mxu0 %v711
    %1051 = vmatpush.bf16.msra.mxu0 %v709
    %1052 = vmatpush.bf16.msra.mxu0 %v707
    %1053 = vmatpush.bf16.msra.mxu0 %v705
    %1054 = vmatpush.bf16.msra.mxu0 %v703
    %1055 = vmatpush.bf16.msra.mxu0 %v701
    %1056 = vmatpush.bf16.msra.mxu0 %v699
    %1057 = vmatpush.bf16.msra.mxu0 %v697
    %1058 = vmatmul.bf16.gmra.mxu0 %v140
    %v1059 = vpop.f32.mrf.mxu0
    %v1060 = vadd.f32 %v1047, %v1059
    %v1061 = vpop.f32.mrf.mxu0
    %1062 = vdwg.mxu0
    %1063 = vmatpush.bf16.msra.mxu0 %v727
    %1064 = vmatpush.bf16.msra.mxu0 %v725
    %1065 = vmatpush.bf16.msra.mxu0 %v723
    %1066 = vmatpush.bf16.msra.mxu0 %v721
    %1067 = vmatpush.bf16.msra.mxu0 %v719
    %1068 = vmatpush.bf16.msra.mxu0 %v717
    %1069 = vmatpush.bf16.msra.mxu0 %v715
    %1070 = vmatpush.bf16.msra.mxu0 %v713
    %1071 = vmatmul.bf16.gmra.mxu0 %v141
    %v1072 = vpop.f32.mrf.mxu0
    %v1073 = vadd.f32 %v1060, %v1072
    %v1074 = vpop.f32.mrf.mxu0
    %1075 = vdwg.mxu0
    %1076 = vmatpush.bf16.msra.mxu0 %v743
    %1077 = vmatpush.bf16.msra.mxu0 %v741
    %1078 = vmatpush.bf16.msra.mxu0 %v739
    %1079 = vmatpush.bf16.msra.mxu0 %v737
    %1080 = vmatpush.bf16.msra.mxu0 %v735
    %1081 = vmatpush.bf16.msra.mxu0 %v733
    %1082 = vmatpush.bf16.msra.mxu0 %v731
    %1083 = vmatpush.bf16.msra.mxu0 %v729
    %1084 = vmatmul.bf16.gmra.mxu0 %v142
    %v1085 = vpop.f32.mrf.mxu0
    %v1086 = vadd.f32 %v1073, %v1085
    %v1087 = vpop.f32.mrf.mxu0
    %1088 = vdwg.mxu0
    %1089 = vmatpush.bf16.msra.mxu0 %v759
    %1090 = vmatpush.bf16.msra.mxu0 %v757
    %1091 = vmatpush.bf16.msra.mxu0 %v755
    %1092 = vmatpush.bf16.msra.mxu0 %v753
    %1093 = vmatpush.bf16.msra.mxu0 %v751
    %1094 = vmatpush.bf16.msra.mxu0 %v749
    %1095 = vmatpush.bf16.msra.mxu0 %v747
    %1096 = vmatpush.bf16.msra.mxu0 %v745
    %1097 = vmatmul.bf16.gmra.mxu0 %v143
    %v1098 = vpop.f32.mrf.mxu0
    %v1099 = vadd.f32 %v1086, %v1098
    %v1100 = vpop.f32.mrf.mxu0
    %1101 = vdwg.mxu0
    %1102 = vmatpush.bf16.msra.mxu0 %v775
    %1103 = vmatpush.bf16.msra.mxu0 %v773
    %1104 = vmatpush.bf16.msra.mxu0 %v771
    %1105 = vmatpush.bf16.msra.mxu0 %v769
    %1106 = vmatpush.bf16.msra.mxu0 %v767
    %1107 = vmatpush.bf16.msra.mxu0 %v765
    %1108 = vmatpush.bf16.msra.mxu0 %v763
    %1109 = vmatpush.bf16.msra.mxu0 %v761
    %1110 = vmatmul.bf16.gmra.mxu0 %v144
    %v1111 = vpop.f32.mrf.mxu0
    %v1112 = vadd.f32 %v1099, %v1111
    %v1113 = vpop.f32.mrf.mxu0
    %1114 = vdwg.mxu0
    %1115 = vmatpush.bf16.msra.mxu0 %v791
    %1116 = vmatpush.bf16.msra.mxu0 %v789
    %1117 = vmatpush.bf16.msra.mxu0 %v787
    %1118 = vmatpush.bf16.msra.mxu0 %v785
    %1119 = vmatpush.bf16.msra.mxu0 %v783
    %1120 = vmatpush.bf16.msra.mxu0 %v781
    %1121 = vmatpush.bf16.msra.mxu0 %v779
    %1122 = vmatpush.bf16.msra.mxu0 %v777
    %1123 = vmatmul.bf16.gmra.mxu0 %v145
    %v1124 = vpop.f32.mrf.mxu0
    %v1125 = vadd.f32 %v1112, %v1124
    %v1126 = vpop.f32.mrf.mxu0
    %1127 = vdwg.mxu0
    %v1128 = vmax.f32 %v1021, -30.0
    %v1129 = vmax.f32 %v1125, -30.0
    %v1130 = vmin.f32 %v1128, 30.0
    %v1131 = vmin.f32 %v1129, 30.0
    %v1132 = vsub.f32 0.0, %v1130
    %v1133 = vsub.f32 0.0, %v1131
    %v1134 = vmul.f32 %v1132, 1.442695
    %v1135 = vpow.pop %v1134
    %v1136 = vmul.f32 %v1133, 1.442695
    %v1137 = vpow.pop %v1136
    %v1138 = vadd.f32 %v1135, 1.0
    %v1139 = vadd.f32 %v1137, 1.0
    %v1140 = vrcp.pop %v1138
    %v1141 = vrcp.pop %v1139
    %v1142 = vpack.c.bf16 %v1140, %v1140
    %v1143 = vpack.c.bf16 %v1141, %v1141
    %v1144 = vld [vmem:[#allocation8] sm:$0xff]
    %v1145 = vld [vmem:[#allocation8 + $0x8] sm:$0xff]
    %v1146 = vld [vmem:[#allocation8 + $0x10] sm:$0xff]
    %v1147 = vld [vmem:[#allocation8 + $0x18] sm:$0xff]
    %v1148 = vld [vmem:[#allocation8 + $0x20] sm:$0xff]
    %v1149 = vld [vmem:[#allocation8 + $0x28] sm:$0xff]
    %v1150 = vld [vmem:[#allocation8 + $0x30] sm:$0xff]
    %v1151 = vld [vmem:[#allocation8 + $0x38] sm:$0xff]
    %v1152 = vld [vmem:[#allocation8 + $0x40] sm:$0xff]
    %v1153 = vld [vmem:[#allocation8 + $0x48] sm:$0xff]
    %v1154 = vld [vmem:[#allocation8 + $0x50] sm:$0xff]
    %v1155 = vld [vmem:[#allocation8 + $0x58] sm:$0xff]
    %v1156 = vld [vmem:[#allocation8 + $0x60] sm:$0xff]
    %v1157 = vld [vmem:[#allocation8 + $0x68] sm:$0xff]
    %v1158 = vld [vmem:[#allocation8 + $0x70] sm:$0xff]
    %v1159 = vld [vmem:[#allocation8 + $0x78] sm:$0xff]
    %v1160 = vld [vmem:[#allocation8 + $0x80] sm:$0xff]
    %v1161 = vld [vmem:[#allocation8 + $0x88] sm:$0xff]
    %v1162 = vld [vmem:[#allocation8 + $0x90] sm:$0xff]
    %v1163 = vld [vmem:[#allocation8 + $0x98] sm:$0xff]
    %v1164 = vld [vmem:[#allocation8 + $0xa0] sm:$0xff]
    %v1165 = vld [vmem:[#allocation8 + $0xa8] sm:$0xff]
    %v1166 = vld [vmem:[#allocation8 + $0xb0] sm:$0xff]
    %v1167 = vld [vmem:[#allocation8 + $0xb8] sm:$0xff]
    %v1168 = vld [vmem:[#allocation8 + $0xc0] sm:$0xff]
    %v1169 = vld [vmem:[#allocation8 + $0xc8] sm:$0xff]
    %v1170 = vld [vmem:[#allocation8 + $0xd0] sm:$0xff]
    %v1171 = vld [vmem:[#allocation8 + $0xd8] sm:$0xff]
    %v1172 = vld [vmem:[#allocation8 + $0xe0] sm:$0xff]
    %v1173 = vld [vmem:[#allocation8 + $0xe8] sm:$0xff]
    %v1174 = vld [vmem:[#allocation8 + $0xf0] sm:$0xff]
    %v1175 = vld [vmem:[#allocation8 + $0xf8] sm:$0xff]
    %v1176 = vld [vmem:[%s4] sm:$0x3]
    %v1178 = vperm.slane %v1176, 0
    %v1179 = vperm.slane %v1176, 1
    %v1214 = vunpack.c.l.b16 %v1144
    %v1215 = vunpack.c.h.b16 %v1144
    %v1216 = vunpack.c.l.b16 %v1145
    %v1217 = vunpack.c.h.b16 %v1145
    %v1218 = vunpack.c.l.b16 %v1146
    %v1219 = vunpack.c.h.b16 %v1146
    %v1220 = vunpack.c.l.b16 %v1147
    %v1221 = vunpack.c.h.b16 %v1147
    %v1222 = vunpack.c.l.b16 %v1148
    %v1223 = vunpack.c.h.b16 %v1148
    %v1224 = vunpack.c.l.b16 %v1149
    %v1225 = vunpack.c.h.b16 %v1149
    %v1226 = vunpack.c.l.b16 %v1150
    %v1227 = vunpack.c.h.b16 %v1150
    %v1228 = vunpack.c.l.b16 %v1151
    %v1229 = vunpack.c.h.b16 %v1151
    %v1230 = vunpack.c.l.b16 %v1152
    %v1231 = vunpack.c.h.b16 %v1152
    %v1232 = vunpack.c.l.b16 %v1153
    %v1233 = vunpack.c.h.b16 %v1153
    %v1234 = vunpack.c.l.b16 %v1154
    %v1235 = vunpack.c.h.b16 %v1154
    %v1236 = vunpack.c.l.b16 %v1155
    %v1237 = vunpack.c.h.b16 %v1155
    %v1238 = vunpack.c.l.b16 %v1156
    %v1239 = vunpack.c.h.b16 %v1156
    %v1240 = vunpack.c.l.b16 %v1157
    %v1241 = vunpack.c.h.b16 %v1157
    %v1242 = vunpack.c.l.b16 %v1158
    %v1243 = vunpack.c.h.b16 %v1158
    %v1244 = vunpack.c.l.b16 %v1159
    %v1245 = vunpack.c.h.b16 %v1159
    %v1246 = vunpack.c.l.b16 %v1160
    %v1247 = vunpack.c.h.b16 %v1160
    %v1248 = vunpack.c.l.b16 %v1161
    %v1249 = vunpack.c.h.b16 %v1161
    %v1250 = vunpack.c.l.b16 %v1162
    %v1251 = vunpack.c.h.b16 %v1162
    %v1252 = vunpack.c.l.b16 %v1163
    %v1253 = vunpack.c.h.b16 %v1163
    %v1254 = vunpack.c.l.b16 %v1164
    %v1255 = vunpack.c.h.b16 %v1164
    %v1256 = vunpack.c.l.b16 %v1165
    %v1257 = vunpack.c.h.b16 %v1165
    %v1258 = vunpack.c.l.b16 %v1166
    %v1259 = vunpack.c.h.b16 %v1166
    %v1260 = vunpack.c.l.b16 %v1167
    %v1261 = vunpack.c.h.b16 %v1167
    %v1262 = vunpack.c.l.b16 %v1168
    %v1263 = vunpack.c.h.b16 %v1168
    %v1264 = vunpack.c.l.b16 %v1169
    %v1265 = vunpack.c.h.b16 %v1169
    %v1266 = vunpack.c.l.b16 %v1170
    %v1267 = vunpack.c.h.b16 %v1170
    %v1268 = vunpack.c.l.b16 %v1171
    %v1269 = vunpack.c.h.b16 %v1171
    %v1270 = vunpack.c.l.b16 %v1172
    %v1271 = vunpack.c.h.b16 %v1172
    %v1272 = vunpack.c.l.b16 %v1173
    %v1273 = vunpack.c.h.b16 %v1173
    %v1274 = vunpack.c.l.b16 %v1174
    %v1275 = vunpack.c.h.b16 %v1174
    %v1276 = vunpack.c.l.b16 %v1175
    %v1277 = vunpack.c.h.b16 %v1175
    %v1278 = vpack.c.b16 %v1216, %v1214
    %v1279 = vpack.c.b16 %v1217, %v1215
    %v1280 = vpack.c.b16 %v1220, %v1218
    %v1281 = vpack.c.b16 %v1221, %v1219
    %v1282 = vpack.c.b16 %v1224, %v1222
    %v1283 = vpack.c.b16 %v1225, %v1223
    %v1284 = vpack.c.b16 %v1228, %v1226
    %v1285 = vpack.c.b16 %v1229, %v1227
    %v1286 = vpack.c.b16 %v1232, %v1230
    %v1287 = vpack.c.b16 %v1233, %v1231
    %v1288 = vpack.c.b16 %v1236, %v1234
    %v1289 = vpack.c.b16 %v1237, %v1235
    %v1290 = vpack.c.b16 %v1240, %v1238
    %v1291 = vpack.c.b16 %v1241, %v1239
    %v1292 = vpack.c.b16 %v1244, %v1242
    %v1293 = vpack.c.b16 %v1245, %v1243
    %v1294 = vpack.c.b16 %v1248, %v1246
    %v1295 = vpack.c.b16 %v1249, %v1247
    %v1296 = vpack.c.b16 %v1252, %v1250
    %v1297 = vpack.c.b16 %v1253, %v1251
    %v1298 = vpack.c.b16 %v1256, %v1254
    %v1299 = vpack.c.b16 %v1257, %v1255
    %v1300 = vpack.c.b16 %v1260, %v1258
    %v1301 = vpack.c.b16 %v1261, %v1259
    %v1302 = vpack.c.b16 %v1264, %v1262
    %v1303 = vpack.c.b16 %v1265, %v1263
    %v1304 = vpack.c.b16 %v1268, %v1266
    %v1305 = vpack.c.b16 %v1269, %v1267
    %v1306 = vpack.c.b16 %v1272, %v1270
    %v1307 = vpack.c.b16 %v1273, %v1271
    %v1308 = vpack.c.b16 %v1276, %v1274
    %v1309 = vpack.c.b16 %v1277, %v1275
    %1342 = vmatpush.bf16.msra.mxu0 %v1292
    %1343 = vmatpush.bf16.msra.mxu0 %v1290
    %1344 = vmatpush.bf16.msra.mxu0 %v1288
    %1345 = vmatpush.bf16.msra.mxu0 %v1286
    %1346 = vmatpush.bf16.msra.mxu0 %v1284
    %1347 = vmatpush.bf16.msra.mxu0 %v1282
    %1348 = vmatpush.bf16.msra.mxu0 %v1280
    %1349 = vmatpush.bf16.msra.mxu0 %v1278
    %1350 = vmatmul.bf16.gmra.mxu0 %v1142
    %v1351 = vpop.f32.mrf.mxu0
    %v1352 = vadd.f32 %v1178, %v1351
    %v1353 = vpop.f32.mrf.mxu0
    %1354 = vdwg.mxu0
    %1355 = vmatpush.bf16.msra.mxu0 %v1308
    %1356 = vmatpush.bf16.msra.mxu0 %v1306
    %1357 = vmatpush.bf16.msra.mxu0 %v1304
    %1358 = vmatpush.bf16.msra.mxu0 %v1302
    %1359 = vmatpush.bf16.msra.mxu0 %v1300
    %1360 = vmatpush.bf16.msra.mxu0 %v1298
    %1361 = vmatpush.bf16.msra.mxu0 %v1296
    %1362 = vmatpush.bf16.msra.mxu0 %v1294
    %1363 = vmatmul.bf16.gmra.mxu0 %v1143
    %v1364 = vpop.f32.mrf.mxu0
    %v1365 = vadd.f32 %v1352, %v1364
    %v1366 = vpop.f32.mrf.mxu0
    %1367 = vdwg.mxu0
    %1368 = vmatpush.bf16.msra.mxu0 %v1293
    %1369 = vmatpush.bf16.msra.mxu0 %v1291
    %1370 = vmatpush.bf16.msra.mxu0 %v1289
    %1371 = vmatpush.bf16.msra.mxu0 %v1287
    %1372 = vmatpush.bf16.msra.mxu0 %v1285
    %1373 = vmatpush.bf16.msra.mxu0 %v1283
    %1374 = vmatpush.bf16.msra.mxu0 %v1281
    %1375 = vmatpush.bf16.msra.mxu0 %v1279
    %1376 = vmatmul.bf16.gmra.mxu0 %v1142
    %v1377 = vpop.f32.mrf.mxu0
    %v1378 = vadd.f32 %v1179, %v1377
    %v1379 = vpop.f32.mrf.mxu0
    %1380 = vdwg.mxu0
    %1381 = vmatpush.bf16.msra.mxu0 %v1309
    %1382 = vmatpush.bf16.msra.mxu0 %v1307
    %1383 = vmatpush.bf16.msra.mxu0 %v1305
    %1384 = vmatpush.bf16.msra.mxu0 %v1303
    %1385 = vmatpush.bf16.msra.mxu0 %v1301
    %1386 = vmatpush.bf16.msra.mxu0 %v1299
    %1387 = vmatpush.bf16.msra.mxu0 %v1297
    %1388 = vmatpush.bf16.msra.mxu0 %v1295
    %1389 = vmatmul.bf16.gmra.mxu0 %v1143
    %v1390 = vpop.f32.mrf.mxu0
    %v1391 = vadd.f32 %v1378, %v1390
    %v1392 = vpop.f32.mrf.mxu0
    %1393 = vdwg.mxu0
    %v1394 = vmax.f32 %v1365, 0.0
    %v1395 = vmax.f32 %v1391, 0.0
    %v1396 = vpack.c.bf16 %v1394, %v1394
    %v1397 = vpack.c.bf16 %v1395, %v1395
    %v1398 = vld [vmem:[#allocation10] sm:$0xff]
    %v1399 = vld [vmem:[#allocation10 + $0x8] sm:$0xff]
    %v1400 = vld [vmem:[#allocation10 + $0x10] sm:$0xff]
    %v1401 = vld [vmem:[#allocation10 + $0x18] sm:$0xff]
    %v1402 = vld [vmem:[#allocation10 + $0x20] sm:$0xff]
    %v1403 = vld [vmem:[#allocation10 + $0x28] sm:$0xff]
    %v1404 = vld [vmem:[#allocation10 + $0x30] sm:$0xff]
    %v1405 = vld [vmem:[#allocation10 + $0x38] sm:$0xff]
    %v1406 = vld [vmem:[#allocation10 + $0x40] sm:$0xff]
    %v1407 = vld [vmem:[#allocation10 + $0x48] sm:$0xff]
    %v1408 = vld [vmem:[#allocation10 + $0x50] sm:$0xff]
    %v1409 = vld [vmem:[#allocation10 + $0x58] sm:$0xff]
    %v1410 = vld [vmem:[#allocation10 + $0x60] sm:$0xff]
    %v1411 = vld [vmem:[#allocation10 + $0x68] sm:$0xff]
    %v1412 = vld [vmem:[#allocation10 + $0x70] sm:$0xff]
    %v1413 = vld [vmem:[#allocation10 + $0x78] sm:$0xff]
    %v1414 = vld [vmem:[#allocation10 + $0x80] sm:$0xff]
    %v1415 = vld [vmem:[#allocation10 + $0x88] sm:$0xff]
    %v1416 = vld [vmem:[#allocation10 + $0x90] sm:$0xff]
    %v1417 = vld [vmem:[#allocation10 + $0x98] sm:$0xff]
    %v1418 = vld [vmem:[#allocation10 + $0xa0] sm:$0xff]
    %v1419 = vld [vmem:[#allocation10 + $0xa8] sm:$0xff]
    %v1420 = vld [vmem:[#allocation10 + $0xb0] sm:$0xff]
    %v1421 = vld [vmem:[#allocation10 + $0xb8] sm:$0xff]
    %v1422 = vld [vmem:[#allocation10 + $0xc0] sm:$0xff]
    %v1423 = vld [vmem:[#allocation10 + $0xc8] sm:$0xff]
    %v1424 = vld [vmem:[#allocation10 + $0xd0] sm:$0xff]
    %v1425 = vld [vmem:[#allocation10 + $0xd8] sm:$0xff]
    %v1426 = vld [vmem:[#allocation10 + $0xe0] sm:$0xff]
    %v1427 = vld [vmem:[#allocation10 + $0xe8] sm:$0xff]
    %v1428 = vld [vmem:[#allocation10 + $0xf0] sm:$0xff]
    %v1429 = vld [vmem:[#allocation10 + $0xf8] sm:$0xff]
    %v1430 = vld [vmem:[#allocation10 + $0x100] sm:$0xff]
    %v1431 = vld [vmem:[#allocation10 + $0x108] sm:$0xff]
    %v1432 = vld [vmem:[#allocation10 + $0x110] sm:$0xff]
    %v1433 = vld [vmem:[#allocation10 + $0x118] sm:$0xff]
    %v1434 = vld [vmem:[#allocation10 + $0x120] sm:$0xff]
    %v1435 = vld [vmem:[#allocation10 + $0x128] sm:$0xff]
    %v1436 = vld [vmem:[#allocation10 + $0x130] sm:$0xff]
    %v1437 = vld [vmem:[#allocation10 + $0x138] sm:$0xff]
    %v1438 = vld [vmem:[#allocation10 + $0x140] sm:$0xff]
    %v1439 = vld [vmem:[#allocation10 + $0x148] sm:$0xff]
    %v1440 = vld [vmem:[#allocation10 + $0x150] sm:$0xff]
    %v1441 = vld [vmem:[#allocation10 + $0x158] sm:$0xff]
    %v1442 = vld [vmem:[#allocation10 + $0x160] sm:$0xff]
    %v1443 = vld [vmem:[#allocation10 + $0x168] sm:$0xff]
    %v1444 = vld [vmem:[#allocation10 + $0x170] sm:$0xff]
    %v1445 = vld [vmem:[#allocation10 + $0x178] sm:$0xff]
    %v1446 = vld [vmem:[#allocation10 + $0x180] sm:$0xff]
    %v1447 = vld [vmem:[#allocation10 + $0x188] sm:$0xff]
    %v1448 = vld [vmem:[#allocation10 + $0x190] sm:$0xff]
    %v1449 = vld [vmem:[#allocation10 + $0x198] sm:$0xff]
    %v1450 = vld [vmem:[#allocation10 + $0x1a0] sm:$0xff]
    %v1451 = vld [vmem:[#allocation10 + $0x1a8] sm:$0xff]
    %v1452 = vld [vmem:[#allocation10 + $0x1b0] sm:$0xff]
    %v1453 = vld [vmem:[#allocation10 + $0x1b8] sm:$0xff]
    %v1454 = vld [vmem:[#allocation10 + $0x1c0] sm:$0xff]
    %v1455 = vld [vmem:[#allocation10 + $0x1c8] sm:$0xff]
    %v1456 = vld [vmem:[#allocation10 + $0x1d0] sm:$0xff]
    %v1457 = vld [vmem:[#allocation10 + $0x1d8] sm:$0xff]
    %v1458 = vld [vmem:[#allocation10 + $0x1e0] sm:$0xff]
    %v1459 = vld [vmem:[#allocation10 + $0x1e8] sm:$0xff]
    %v1460 = vld [vmem:[#allocation10 + $0x1f0] sm:$0xff]
    %v1461 = vld [vmem:[#allocation10 + $0x1f8] sm:$0xff]
    %v1462 = vld [vmem:[#allocation10 + $0x200] sm:$0xff]
    %v1463 = vld [vmem:[#allocation10 + $0x208] sm:$0xff]
    %v1464 = vld [vmem:[#allocation10 + $0x210] sm:$0xff]
    %v1465 = vld [vmem:[#allocation10 + $0x218] sm:$0xff]
    %v1466 = vld [vmem:[#allocation10 + $0x220] sm:$0xff]
    %v1467 = vld [vmem:[#allocation10 + $0x228] sm:$0xff]
    %v1468 = vld [vmem:[#allocation10 + $0x230] sm:$0xff]
    %v1469 = vld [vmem:[#allocation10 + $0x238] sm:$0xff]
    %v1470 = vld [vmem:[#allocation10 + $0x240] sm:$0xff]
    %v1471 = vld [vmem:[#allocation10 + $0x248] sm:$0xff]
    %v1472 = vld [vmem:[#allocation10 + $0x250] sm:$0xff]
    %v1473 = vld [vmem:[#allocation10 + $0x258] sm:$0xff]
    %v1474 = vld [vmem:[#allocation10 + $0x260] sm:$0xff]
    %v1475 = vld [vmem:[#allocation10 + $0x268] sm:$0xff]
    %v1476 = vld [vmem:[#allocation10 + $0x270] sm:$0xff]
    %v1477 = vld [vmem:[#allocation10 + $0x278] sm:$0xff]
    %v1478 = vld [vmem:[#allocation10 + $0x280] sm:$0xff]
    %v1479 = vld [vmem:[#allocation10 + $0x288] sm:$0xff]
    %v1480 = vld [vmem:[#allocation10 + $0x290] sm:$0xff]
    %v1481 = vld [vmem:[#allocation10 + $0x298] sm:$0xff]
    %v1482 = vld [vmem:[#allocation10 + $0x2a0] sm:$0xff]
    %v1483 = vld [vmem:[#allocation10 + $0x2a8] sm:$0xff]
    %v1484 = vld [vmem:[#allocation10 + $0x2b0] sm:$0xff]
    %v1485 = vld [vmem:[#allocation10 + $0x2b8] sm:$0xff]
    %v1486 = vld [vmem:[#allocation10 + $0x2c0] sm:$0xff]
    %v1487 = vld [vmem:[#allocation10 + $0x2c8] sm:$0xff]
    %v1488 = vld [vmem:[#allocation10 + $0x2d0] sm:$0xff]
    %v1489 = vld [vmem:[#allocation10 + $0x2d8] sm:$0xff]
    %v1490 = vld [vmem:[#allocation10 + $0x2e0] sm:$0xff]
    %v1491 = vld [vmem:[#allocation10 + $0x2e8] sm:$0xff]
    %v1492 = vld [vmem:[#allocation10 + $0x2f0] sm:$0xff]
    %v1493 = vld [vmem:[#allocation10 + $0x2f8] sm:$0xff]
    %v1494 = vld [vmem:[#allocation10 + $0x300] sm:$0xff]
    %v1495 = vld [vmem:[#allocation10 + $0x308] sm:$0xff]
    %v1496 = vld [vmem:[#allocation10 + $0x310] sm:$0xff]
    %v1497 = vld [vmem:[#allocation10 + $0x318] sm:$0xff]
    %v1498 = vld [vmem:[#allocation10 + $0x320] sm:$0xff]
    %v1499 = vld [vmem:[#allocation10 + $0x328] sm:$0xff]
    %v1500 = vld [vmem:[#allocation10 + $0x330] sm:$0xff]
    %v1501 = vld [vmem:[#allocation10 + $0x338] sm:$0xff]
    %v1502 = vld [vmem:[#allocation10 + $0x340] sm:$0xff]
    %v1503 = vld [vmem:[#allocation10 + $0x348] sm:$0xff]
    %v1504 = vld [vmem:[#allocation10 + $0x350] sm:$0xff]
    %v1505 = vld [vmem:[#allocation10 + $0x358] sm:$0xff]
    %v1506 = vld [vmem:[#allocation10 + $0x360] sm:$0xff]
    %v1507 = vld [vmem:[#allocation10 + $0x368] sm:$0xff]
    %v1508 = vld [vmem:[#allocation10 + $0x370] sm:$0xff]
    %v1509 = vld [vmem:[#allocation10 + $0x378] sm:$0xff]
    %v1510 = vld [vmem:[#allocation10 + $0x380] sm:$0xff]
    %v1511 = vld [vmem:[#allocation10 + $0x388] sm:$0xff]
    %v1512 = vld [vmem:[#allocation10 + $0x390] sm:$0xff]
    %v1513 = vld [vmem:[#allocation10 + $0x398] sm:$0xff]
    %v1514 = vld [vmem:[#allocation10 + $0x3a0] sm:$0xff]
    %v1515 = vld [vmem:[#allocation10 + $0x3a8] sm:$0xff]
    %v1516 = vld [vmem:[#allocation10 + $0x3b0] sm:$0xff]
    %v1517 = vld [vmem:[#allocation10 + $0x3b8] sm:$0xff]
    %v1518 = vld [vmem:[#allocation10 + $0x3c0] sm:$0xff]
    %v1519 = vld [vmem:[#allocation10 + $0x3c8] sm:$0xff]
    %v1520 = vld [vmem:[#allocation10 + $0x3d0] sm:$0xff]
    %v1521 = vld [vmem:[#allocation10 + $0x3d8] sm:$0xff]
    %v1522 = vld [vmem:[#allocation10 + $0x3e0] sm:$0xff]
    %v1523 = vld [vmem:[#allocation10 + $0x3e8] sm:$0xff]
    %v1524 = vld [vmem:[#allocation10 + $0x3f0] sm:$0xff]
    %v1525 = vld [vmem:[#allocation10 + $0x3f8] sm:$0xff]
    %v1526 = vld [vmem:[#allocation11] sm:$0xff]
    %v1528 = vperm.slane %v1526, 0
    %v1529 = vperm.slane %v1526, 1
    %v1530 = vperm.slane %v1526, 2
    %v1531 = vperm.slane %v1526, 3
    %v1532 = vperm.slane %v1526, 4
    %v1533 = vperm.slane %v1526, 5
    %v1534 = vperm.slane %v1526, 6
    %v1535 = vperm.slane %v1526, 7
    %v1672 = vunpack.c.l.b16 %v1398
    %v1673 = vunpack.c.h.b16 %v1398
    %v1674 = vunpack.c.l.b16 %v1399
    %v1675 = vunpack.c.h.b16 %v1399
    %v1676 = vunpack.c.l.b16 %v1400
    %v1677 = vunpack.c.h.b16 %v1400
    %v1678 = vunpack.c.l.b16 %v1401
    %v1679 = vunpack.c.h.b16 %v1401
    %v1680 = vunpack.c.l.b16 %v1402
    %v1681 = vunpack.c.h.b16 %v1402
    %v1682 = vunpack.c.l.b16 %v1403
    %v1683 = vunpack.c.h.b16 %v1403
    %v1684 = vunpack.c.l.b16 %v1404
    %v1685 = vunpack.c.h.b16 %v1404
    %v1686 = vunpack.c.l.b16 %v1405
    %v1687 = vunpack.c.h.b16 %v1405
    %v1688 = vunpack.c.l.b16 %v1406
    %v1689 = vunpack.c.h.b16 %v1406
    %v1690 = vunpack.c.l.b16 %v1407
    %v1691 = vunpack.c.h.b16 %v1407
    %v1692 = vunpack.c.l.b16 %v1408
    %v1693 = vunpack.c.h.b16 %v1408
    %v1694 = vunpack.c.l.b16 %v1409
    %v1695 = vunpack.c.h.b16 %v1409
    %v1696 = vunpack.c.l.b16 %v1410
    %v1697 = vunpack.c.h.b16 %v1410
    %v1698 = vunpack.c.l.b16 %v1411
    %v1699 = vunpack.c.h.b16 %v1411
    %v1700 = vunpack.c.l.b16 %v1412
    %v1701 = vunpack.c.h.b16 %v1412
    %v1702 = vunpack.c.l.b16 %v1413
    %v1703 = vunpack.c.h.b16 %v1413
    %v1704 = vunpack.c.l.b16 %v1414
    %v1705 = vunpack.c.h.b16 %v1414
    %v1706 = vunpack.c.l.b16 %v1415
    %v1707 = vunpack.c.h.b16 %v1415
    %v1708 = vunpack.c.l.b16 %v1416
    %v1709 = vunpack.c.h.b16 %v1416
    %v1710 = vunpack.c.l.b16 %v1417
    %v1711 = vunpack.c.h.b16 %v1417
    %v1712 = vunpack.c.l.b16 %v1418
    %v1713 = vunpack.c.h.b16 %v1418
    %v1714 = vunpack.c.l.b16 %v1419
    %v1715 = vunpack.c.h.b16 %v1419
    %v1716 = vunpack.c.l.b16 %v1420
    %v1717 = vunpack.c.h.b16 %v1420
    %v1718 = vunpack.c.l.b16 %v1421
    %v1719 = vunpack.c.h.b16 %v1421
    %v1720 = vunpack.c.l.b16 %v1422
    %v1721 = vunpack.c.h.b16 %v1422
    %v1722 = vunpack.c.l.b16 %v1423
    %v1723 = vunpack.c.h.b16 %v1423
    %v1724 = vunpack.c.l.b16 %v1424
    %v1725 = vunpack.c.h.b16 %v1424
    %v1726 = vunpack.c.l.b16 %v1425
    %v1727 = vunpack.c.h.b16 %v1425
    %v1728 = vunpack.c.l.b16 %v1426
    %v1729 = vunpack.c.h.b16 %v1426
    %v1730 = vunpack.c.l.b16 %v1427
    %v1731 = vunpack.c.h.b16 %v1427
    %v1732 = vunpack.c.l.b16 %v1428
    %v1733 = vunpack.c.h.b16 %v1428
    %v1734 = vunpack.c.l.b16 %v1429
    %v1735 = vunpack.c.h.b16 %v1429
    %v1736 = vunpack.c.l.b16 %v1430
    %v1737 = vunpack.c.h.b16 %v1430
    %v1738 = vunpack.c.l.b16 %v1431
    %v1739 = vunpack.c.h.b16 %v1431
    %v1740 = vunpack.c.l.b16 %v1432
    %v1741 = vunpack.c.h.b16 %v1432
    %v1742 = vunpack.c.l.b16 %v1433
    %v1743 = vunpack.c.h.b16 %v1433
    %v1744 = vunpack.c.l.b16 %v1434
    %v1745 = vunpack.c.h.b16 %v1434
    %v1746 = vunpack.c.l.b16 %v1435
    %v1747 = vunpack.c.h.b16 %v1435
    %v1748 = vunpack.c.l.b16 %v1436
    %v1749 = vunpack.c.h.b16 %v1436
    %v1750 = vunpack.c.l.b16 %v1437
    %v1751 = vunpack.c.h.b16 %v1437
    %v1752 = vunpack.c.l.b16 %v1438
    %v1753 = vunpack.c.h.b16 %v1438
    %v1754 = vunpack.c.l.b16 %v1439
    %v1755 = vunpack.c.h.b16 %v1439
    %v1756 = vunpack.c.l.b16 %v1440
    %v1757 = vunpack.c.h.b16 %v1440
    %v1758 = vunpack.c.l.b16 %v1441
    %v1759 = vunpack.c.h.b16 %v1441
    %v1760 = vunpack.c.l.b16 %v1442
    %v1761 = vunpack.c.h.b16 %v1442
    %v1762 = vunpack.c.l.b16 %v1443
    %v1763 = vunpack.c.h.b16 %v1443
    %v1764 = vunpack.c.l.b16 %v1444
    %v1765 = vunpack.c.h.b16 %v1444
    %v1766 = vunpack.c.l.b16 %v1445
    %v1767 = vunpack.c.h.b16 %v1445
    %v1768 = vunpack.c.l.b16 %v1446
    %v1769 = vunpack.c.h.b16 %v1446
    %v1770 = vunpack.c.l.b16 %v1447
    %v1771 = vunpack.c.h.b16 %v1447
    %v1772 = vunpack.c.l.b16 %v1448
    %v1773 = vunpack.c.h.b16 %v1448
    %v1774 = vunpack.c.l.b16 %v1449
    %v1775 = vunpack.c.h.b16 %v1449
    %v1776 = vunpack.c.l.b16 %v1450
    %v1777 = vunpack.c.h.b16 %v1450
    %v1778 = vunpack.c.l.b16 %v1451
    %v1779 = vunpack.c.h.b16 %v1451
    %v1780 = vunpack.c.l.b16 %v1452
    %v1781 = vunpack.c.h.b16 %v1452
    %v1782 = vunpack.c.l.b16 %v1453
    %v1783 = vunpack.c.h.b16 %v1453
    %v1784 = vunpack.c.l.b16 %v1454
    %v1785 = vunpack.c.h.b16 %v1454
    %v1786 = vunpack.c.l.b16 %v1455
    %v1787 = vunpack.c.h.b16 %v1455
    %v1788 = vunpack.c.l.b16 %v1456
    %v1789 = vunpack.c.h.b16 %v1456
    %v1790 = vunpack.c.l.b16 %v1457
    %v1791 = vunpack.c.h.b16 %v1457
    %v1792 = vunpack.c.l.b16 %v1458
    %v1793 = vunpack.c.h.b16 %v1458
    %v1794 = vunpack.c.l.b16 %v1459
    %v1795 = vunpack.c.h.b16 %v1459
    %v1796 = vunpack.c.l.b16 %v1460
    %v1797 = vunpack.c.h.b16 %v1460
    %v1798 = vunpack.c.l.b16 %v1461
    %v1799 = vunpack.c.h.b16 %v1461
    %v1800 = vunpack.c.l.b16 %v1462
    %v1801 = vunpack.c.h.b16 %v1462
    %v1802 = vunpack.c.l.b16 %v1463
    %v1803 = vunpack.c.h.b16 %v1463
    %v1804 = vunpack.c.l.b16 %v1464
    %v1805 = vunpack.c.h.b16 %v1464
    %v1806 = vunpack.c.l.b16 %v1465
    %v1807 = vunpack.c.h.b16 %v1465
    %v1808 = vunpack.c.l.b16 %v1466
    %v1809 = vunpack.c.h.b16 %v1466
    %v1810 = vunpack.c.l.b16 %v1467
    %v1811 = vunpack.c.h.b16 %v1467
    %v1812 = vunpack.c.l.b16 %v1468
    %v1813 = vunpack.c.h.b16 %v1468
    %v1814 = vunpack.c.l.b16 %v1469
    %v1815 = vunpack.c.h.b16 %v1469
    %v1816 = vunpack.c.l.b16 %v1470
    %v1817 = vunpack.c.h.b16 %v1470
    %v1818 = vunpack.c.l.b16 %v1471
    %v1819 = vunpack.c.h.b16 %v1471
    %v1820 = vunpack.c.l.b16 %v1472
    %v1821 = vunpack.c.h.b16 %v1472
    %v1822 = vunpack.c.l.b16 %v1473
    %v1823 = vunpack.c.h.b16 %v1473
    %v1824 = vunpack.c.l.b16 %v1474
    %v1825 = vunpack.c.h.b16 %v1474
    %v1826 = vunpack.c.l.b16 %v1475
    %v1827 = vunpack.c.h.b16 %v1475
    %v1828 = vunpack.c.l.b16 %v1476
    %v1829 = vunpack.c.h.b16 %v1476
    %v1830 = vunpack.c.l.b16 %v1477
    %v1831 = vunpack.c.h.b16 %v1477
    %v1832 = vunpack.c.l.b16 %v1478
    %v1833 = vunpack.c.h.b16 %v1478
    %v1834 = vunpack.c.l.b16 %v1479
    %v1835 = vunpack.c.h.b16 %v1479
    %v1836 = vunpack.c.l.b16 %v1480
    %v1837 = vunpack.c.h.b16 %v1480
    %v1838 = vunpack.c.l.b16 %v1481
    %v1839 = vunpack.c.h.b16 %v1481
    %v1840 = vunpack.c.l.b16 %v1482
    %v1841 = vunpack.c.h.b16 %v1482
    %v1842 = vunpack.c.l.b16 %v1483
    %v1843 = vunpack.c.h.b16 %v1483
    %v1844 = vunpack.c.l.b16 %v1484
    %v1845 = vunpack.c.h.b16 %v1484
    %v1846 = vunpack.c.l.b16 %v1485
    %v1847 = vunpack.c.h.b16 %v1485
    %v1848 = vunpack.c.l.b16 %v1486
    %v1849 = vunpack.c.h.b16 %v1486
    %v1850 = vunpack.c.l.b16 %v1487
    %v1851 = vunpack.c.h.b16 %v1487
    %v1852 = vunpack.c.l.b16 %v1488
    %v1853 = vunpack.c.h.b16 %v1488
    %v1854 = vunpack.c.l.b16 %v1489
    %v1855 = vunpack.c.h.b16 %v1489
    %v1856 = vunpack.c.l.b16 %v1490
    %v1857 = vunpack.c.h.b16 %v1490
    %v1858 = vunpack.c.l.b16 %v1491
    %v1859 = vunpack.c.h.b16 %v1491
    %v1860 = vunpack.c.l.b16 %v1492
    %v1861 = vunpack.c.h.b16 %v1492
    %v1862 = vunpack.c.l.b16 %v1493
    %v1863 = vunpack.c.h.b16 %v1493
    %v1864 = vunpack.c.l.b16 %v1494
    %v1865 = vunpack.c.h.b16 %v1494
    %v1866 = vunpack.c.l.b16 %v1495
    %v1867 = vunpack.c.h.b16 %v1495
    %v1868 = vunpack.c.l.b16 %v1496
    %v1869 = vunpack.c.h.b16 %v1496
    %v1870 = vunpack.c.l.b16 %v1497
    %v1871 = vunpack.c.h.b16 %v1497
    %v1872 = vunpack.c.l.b16 %v1498
    %v1873 = vunpack.c.h.b16 %v1498
    %v1874 = vunpack.c.l.b16 %v1499
    %v1875 = vunpack.c.h.b16 %v1499
    %v1876 = vunpack.c.l.b16 %v1500
    %v1877 = vunpack.c.h.b16 %v1500
    %v1878 = vunpack.c.l.b16 %v1501
    %v1879 = vunpack.c.h.b16 %v1501
    %v1880 = vunpack.c.l.b16 %v1502
    %v1881 = vunpack.c.h.b16 %v1502
    %v1882 = vunpack.c.l.b16 %v1503
    %v1883 = vunpack.c.h.b16 %v1503
    %v1884 = vunpack.c.l.b16 %v1504
    %v1885 = vunpack.c.h.b16 %v1504
    %v1886 = vunpack.c.l.b16 %v1505
    %v1887 = vunpack.c.h.b16 %v1505
    %v1888 = vunpack.c.l.b16 %v1506
    %v1889 = vunpack.c.h.b16 %v1506
    %v1890 = vunpack.c.l.b16 %v1507
    %v1891 = vunpack.c.h.b16 %v1507
    %v1892 = vunpack.c.l.b16 %v1508
    %v1893 = vunpack.c.h.b16 %v1508
    %v1894 = vunpack.c.l.b16 %v1509
    %v1895 = vunpack.c.h.b16 %v1509
    %v1896 = vunpack.c.l.b16 %v1510
    %v1897 = vunpack.c.h.b16 %v1510
    %v1898 = vunpack.c.l.b16 %v1511
    %v1899 = vunpack.c.h.b16 %v1511
    %v1900 = vunpack.c.l.b16 %v1512
    %v1901 = vunpack.c.h.b16 %v1512
    %v1902 = vunpack.c.l.b16 %v1513
    %v1903 = vunpack.c.h.b16 %v1513
    %v1904 = vunpack.c.l.b16 %v1514
    %v1905 = vunpack.c.h.b16 %v1514
    %v1906 = vunpack.c.l.b16 %v1515
    %v1907 = vunpack.c.h.b16 %v1515
    %v1908 = vunpack.c.l.b16 %v1516
    %v1909 = vunpack.c.h.b16 %v1516
    %v1910 = vunpack.c.l.b16 %v1517
    %v1911 = vunpack.c.h.b16 %v1517
    %v1912 = vunpack.c.l.b16 %v1518
    %v1913 = vunpack.c.h.b16 %v1518
    %v1914 = vunpack.c.l.b16 %v1519
    %v1915 = vunpack.c.h.b16 %v1519
    %v1916 = vunpack.c.l.b16 %v1520
    %v1917 = vunpack.c.h.b16 %v1520
    %v1918 = vunpack.c.l.b16 %v1521
    %v1919 = vunpack.c.h.b16 %v1521
    %v1920 = vunpack.c.l.b16 %v1522
    %v1921 = vunpack.c.h.b16 %v1522
    %v1922 = vunpack.c.l.b16 %v1523
    %v1923 = vunpack.c.h.b16 %v1523
    %v1924 = vunpack.c.l.b16 %v1524
    %v1925 = vunpack.c.h.b16 %v1524
    %v1926 = vunpack.c.l.b16 %v1525
    %v1927 = vunpack.c.h.b16 %v1525
    %v1928 = vpack.c.b16 %v1680, %v1672
    %v1929 = vpack.c.b16 %v1681, %v1673
    %v1930 = vpack.c.b16 %v1682, %v1674
    %v1931 = vpack.c.b16 %v1683, %v1675
    %v1932 = vpack.c.b16 %v1684, %v1676
    %v1933 = vpack.c.b16 %v1685, %v1677
    %v1934 = vpack.c.b16 %v1686, %v1678
    %v1935 = vpack.c.b16 %v1687, %v1679
    %v1936 = vpack.c.b16 %v1696, %v1688
    %v1937 = vpack.c.b16 %v1697, %v1689
    %v1938 = vpack.c.b16 %v1698, %v1690
    %v1939 = vpack.c.b16 %v1699, %v1691
    %v1940 = vpack.c.b16 %v1700, %v1692
    %v1941 = vpack.c.b16 %v1701, %v1693
    %v1942 = vpack.c.b16 %v1702, %v1694
    %v1943 = vpack.c.b16 %v1703, %v1695
    %v1944 = vpack.c.b16 %v1712, %v1704
    %v1945 = vpack.c.b16 %v1713, %v1705
    %v1946 = vpack.c.b16 %v1714, %v1706
    %v1947 = vpack.c.b16 %v1715, %v1707
    %v1948 = vpack.c.b16 %v1716, %v1708
    %v1949 = vpack.c.b16 %v1717, %v1709
    %v1950 = vpack.c.b16 %v1718, %v1710
    %v1951 = vpack.c.b16 %v1719, %v1711
    %v1952 = vpack.c.b16 %v1728, %v1720
    %v1953 = vpack.c.b16 %v1729, %v1721
    %v1954 = vpack.c.b16 %v1730, %v1722
    %v1955 = vpack.c.b16 %v1731, %v1723
    %v1956 = vpack.c.b16 %v1732, %v1724
    %v1957 = vpack.c.b16 %v1733, %v1725
    %v1958 = vpack.c.b16 %v1734, %v1726
    %v1959 = vpack.c.b16 %v1735, %v1727
    %v1960 = vpack.c.b16 %v1744, %v1736
    %v1961 = vpack.c.b16 %v1745, %v1737
    %v1962 = vpack.c.b16 %v1746, %v1738
    %v1963 = vpack.c.b16 %v1747, %v1739
    %v1964 = vpack.c.b16 %v1748, %v1740
    %v1965 = vpack.c.b16 %v1749, %v1741
    %v1966 = vpack.c.b16 %v1750, %v1742
    %v1967 = vpack.c.b16 %v1751, %v1743
    %v1968 = vpack.c.b16 %v1760, %v1752
    %v1969 = vpack.c.b16 %v1761, %v1753
    %v1970 = vpack.c.b16 %v1762, %v1754
    %v1971 = vpack.c.b16 %v1763, %v1755
    %v1972 = vpack.c.b16 %v1764, %v1756
    %v1973 = vpack.c.b16 %v1765, %v1757
    %v1974 = vpack.c.b16 %v1766, %v1758
    %v1975 = vpack.c.b16 %v1767, %v1759
    %v1976 = vpack.c.b16 %v1776, %v1768
    %v1977 = vpack.c.b16 %v1777, %v1769
    %v1978 = vpack.c.b16 %v1778, %v1770
    %v1979 = vpack.c.b16 %v1779, %v1771
    %v1980 = vpack.c.b16 %v1780, %v1772
    %v1981 = vpack.c.b16 %v1781, %v1773
    %v1982 = vpack.c.b16 %v1782, %v1774
    %v1983 = vpack.c.b16 %v1783, %v1775
    %v1984 = vpack.c.b16 %v1792, %v1784
    %v1985 = vpack.c.b16 %v1793, %v1785
    %v1986 = vpack.c.b16 %v1794, %v1786
    %v1987 = vpack.c.b16 %v1795, %v1787
    %v1988 = vpack.c.b16 %v1796, %v1788
    %v1989 = vpack.c.b16 %v1797, %v1789
    %v1990 = vpack.c.b16 %v1798, %v1790
    %v1991 = vpack.c.b16 %v1799, %v1791
    %v1992 = vpack.c.b16 %v1808, %v1800
    %v1993 = vpack.c.b16 %v1809, %v1801
    %v1994 = vpack.c.b16 %v1810, %v1802
    %v1995 = vpack.c.b16 %v1811, %v1803
    %v1996 = vpack.c.b16 %v1812, %v1804
    %v1997 = vpack.c.b16 %v1813, %v1805
    %v1998 = vpack.c.b16 %v1814, %v1806
    %v1999 = vpack.c.b16 %v1815, %v1807
    %v2000 = vpack.c.b16 %v1824, %v1816
    %v2001 = vpack.c.b16 %v1825, %v1817
    %v2002 = vpack.c.b16 %v1826, %v1818
    %v2003 = vpack.c.b16 %v1827, %v1819
    %v2004 = vpack.c.b16 %v1828, %v1820
    %v2005 = vpack.c.b16 %v1829, %v1821
    %v2006 = vpack.c.b16 %v1830, %v1822
    %v2007 = vpack.c.b16 %v1831, %v1823
    %v2008 = vpack.c.b16 %v1840, %v1832
    %v2009 = vpack.c.b16 %v1841, %v1833
    %v2010 = vpack.c.b16 %v1842, %v1834
    %v2011 = vpack.c.b16 %v1843, %v1835
    %v2012 = vpack.c.b16 %v1844, %v1836
    %v2013 = vpack.c.b16 %v1845, %v1837
    %v2014 = vpack.c.b16 %v1846, %v1838
    %v2015 = vpack.c.b16 %v1847, %v1839
    %v2016 = vpack.c.b16 %v1856, %v1848
    %v2017 = vpack.c.b16 %v1857, %v1849
    %v2018 = vpack.c.b16 %v1858, %v1850
    %v2019 = vpack.c.b16 %v1859, %v1851
    %v2020 = vpack.c.b16 %v1860, %v1852
    %v2021 = vpack.c.b16 %v1861, %v1853
    %v2022 = vpack.c.b16 %v1862, %v1854
    %v2023 = vpack.c.b16 %v1863, %v1855
    %v2024 = vpack.c.b16 %v1872, %v1864
    %v2025 = vpack.c.b16 %v1873, %v1865
    %v2026 = vpack.c.b16 %v1874, %v1866
    %v2027 = vpack.c.b16 %v1875, %v1867
    %v2028 = vpack.c.b16 %v1876, %v1868
    %v2029 = vpack.c.b16 %v1877, %v1869
    %v2030 = vpack.c.b16 %v1878, %v1870
    %v2031 = vpack.c.b16 %v1879, %v1871
    %v2032 = vpack.c.b16 %v1888, %v1880
    %v2033 = vpack.c.b16 %v1889, %v1881
    %v2034 = vpack.c.b16 %v1890, %v1882
    %v2035 = vpack.c.b16 %v1891, %v1883
    %v2036 = vpack.c.b16 %v1892, %v1884
    %v2037 = vpack.c.b16 %v1893, %v1885
    %v2038 = vpack.c.b16 %v1894, %v1886
    %v2039 = vpack.c.b16 %v1895, %v1887
    %v2040 = vpack.c.b16 %v1904, %v1896
    %v2041 = vpack.c.b16 %v1905, %v1897
    %v2042 = vpack.c.b16 %v1906, %v1898
    %v2043 = vpack.c.b16 %v1907, %v1899
    %v2044 = vpack.c.b16 %v1908, %v1900
    %v2045 = vpack.c.b16 %v1909, %v1901
    %v2046 = vpack.c.b16 %v1910, %v1902
    %v2047 = vpack.c.b16 %v1911, %v1903
    %v2048 = vpack.c.b16 %v1920, %v1912
    %v2049 = vpack.c.b16 %v1921, %v1913
    %v2050 = vpack.c.b16 %v1922, %v1914
    %v2051 = vpack.c.b16 %v1923, %v1915
    %v2052 = vpack.c.b16 %v1924, %v1916
    %v2053 = vpack.c.b16 %v1925, %v1917
    %v2054 = vpack.c.b16 %v1926, %v1918
    %v2055 = vpack.c.b16 %v1927, %v1919
    %2184 = vmatpush.bf16.msra.mxu0 %v1984
    %2185 = vmatpush.bf16.msra.mxu0 %v1976
    %2186 = vmatpush.bf16.msra.mxu0 %v1968
    %2187 = vmatpush.bf16.msra.mxu0 %v1960
    %2188 = vmatpush.bf16.msra.mxu0 %v1952
    %2189 = vmatpush.bf16.msra.mxu0 %v1944
    %2190 = vmatpush.bf16.msra.mxu0 %v1936
    %2191 = vmatpush.bf16.msra.mxu0 %v1928
    %2192 = vmatmul.bf16.gmra.mxu0 %v1396
    %v2193 = vpop.f32.mrf.mxu0
    %v2194 = vadd.f32 %v1528, %v2193
    %v2195 = vpop.f32.mrf.mxu0
    %2196 = vdwg.mxu0
    %2197 = vmatpush.bf16.msra.mxu0 %v2048
    %2198 = vmatpush.bf16.msra.mxu0 %v2040
    %2199 = vmatpush.bf16.msra.mxu0 %v2032
    %2200 = vmatpush.bf16.msra.mxu0 %v2024
    %2201 = vmatpush.bf16.msra.mxu0 %v2016
    %2202 = vmatpush.bf16.msra.mxu0 %v2008
    %2203 = vmatpush.bf16.msra.mxu0 %v2000
    %2204 = vmatpush.bf16.msra.mxu0 %v1992
    %2205 = vmatmul.bf16.gmra.mxu0 %v1397
    %v2206 = vpop.f32.mrf.mxu0
    %v2207 = vadd.f32 %v2194, %v2206
    %v2208 = vpop.f32.mrf.mxu0
    %2209 = vdwg.mxu0
    %2210 = vmatpush.bf16.msra.mxu0 %v1985
    %2211 = vmatpush.bf16.msra.mxu0 %v1977
    %2212 = vmatpush.bf16.msra.mxu0 %v1969
    %2213 = vmatpush.bf16.msra.mxu0 %v1961
    %2214 = vmatpush.bf16.msra.mxu0 %v1953
    %2215 = vmatpush.bf16.msra.mxu0 %v1945
    %2216 = vmatpush.bf16.msra.mxu0 %v1937
    %2217 = vmatpush.bf16.msra.mxu0 %v1929
    %2218 = vmatmul.bf16.gmra.mxu0 %v1396
    %v2219 = vpop.f32.mrf.mxu0
    %v2220 = vadd.f32 %v1529, %v2219
    %v2221 = vpop.f32.mrf.mxu0
    %2222 = vdwg.mxu0
    %2223 = vmatpush.bf16.msra.mxu0 %v2049
    %2224 = vmatpush.bf16.msra.mxu0 %v2041
    %2225 = vmatpush.bf16.msra.mxu0 %v2033
    %2226 = vmatpush.bf16.msra.mxu0 %v2025
    %2227 = vmatpush.bf16.msra.mxu0 %v2017
    %2228 = vmatpush.bf16.msra.mxu0 %v2009
    %2229 = vmatpush.bf16.msra.mxu0 %v2001
    %2230 = vmatpush.bf16.msra.mxu0 %v1993
    %2231 = vmatmul.bf16.gmra.mxu0 %v1397
    %v2232 = vpop.f32.mrf.mxu0
    %v2233 = vadd.f32 %v2220, %v2232
    %v2234 = vpop.f32.mrf.mxu0
    %2235 = vdwg.mxu0
    %2236 = vmatpush.bf16.msra.mxu0 %v1986
    %2237 = vmatpush.bf16.msra.mxu0 %v1978
    %2238 = vmatpush.bf16.msra.mxu0 %v1970
    %2239 = vmatpush.bf16.msra.mxu0 %v1962
    %2240 = vmatpush.bf16.msra.mxu0 %v1954
    %2241 = vmatpush.bf16.msra.mxu0 %v1946
    %2242 = vmatpush.bf16.msra.mxu0 %v1938
    %2243 = vmatpush.bf16.msra.mxu0 %v1930
    %2244 = vmatmul.bf16.gmra.mxu0 %v1396
    %v2245 = vpop.f32.mrf.mxu0
    %v2246 = vadd.f32 %v1530, %v2245
    %v2247 = vpop.f32.mrf.mxu0
    %2248 = vdwg.mxu0
    %2249 = vmatpush.bf16.msra.mxu0 %v2050
    %2250 = vmatpush.bf16.msra.mxu0 %v2042
    %2251 = vmatpush.bf16.msra.mxu0 %v2034
    %2252 = vmatpush.bf16.msra.mxu0 %v2026
    %2253 = vmatpush.bf16.msra.mxu0 %v2018
    %2254 = vmatpush.bf16.msra.mxu0 %v2010
    %2255 = vmatpush.bf16.msra.mxu0 %v2002
    %2256 = vmatpush.bf16.msra.mxu0 %v1994
    %2257 = vmatmul.bf16.gmra.mxu0 %v1397
    %v2258 = vpop.f32.mrf.mxu0
    %v2259 = vadd.f32 %v2246, %v2258
    %v2260 = vpop.f32.mrf.mxu0
    %2261 = vdwg.mxu0
    %2262 = vmatpush.bf16.msra.mxu0 %v1987
    %2263 = vmatpush.bf16.msra.mxu0 %v1979
    %2264 = vmatpush.bf16.msra.mxu0 %v1971
    %2265 = vmatpush.bf16.msra.mxu0 %v1963
    %2266 = vmatpush.bf16.msra.mxu0 %v1955
    %2267 = vmatpush.bf16.msra.mxu0 %v1947
    %2268 = vmatpush.bf16.msra.mxu0 %v1939
    %2269 = vmatpush.bf16.msra.mxu0 %v1931
    %2270 = vmatmul.bf16.gmra.mxu0 %v1396
    %v2271 = vpop.f32.mrf.mxu0
    %v2272 = vadd.f32 %v1531, %v2271
    %v2273 = vpop.f32.mrf.mxu0
    %2274 = vdwg.mxu0
    %2275 = vmatpush.bf16.msra.mxu0 %v2051
    %2276 = vmatpush.bf16.msra.mxu0 %v2043
    %2277 = vmatpush.bf16.msra.mxu0 %v2035
    %2278 = vmatpush.bf16.msra.mxu0 %v2027
    %2279 = vmatpush.bf16.msra.mxu0 %v2019
    %2280 = vmatpush.bf16.msra.mxu0 %v2011
    %2281 = vmatpush.bf16.msra.mxu0 %v2003
    %2282 = vmatpush.bf16.msra.mxu0 %v1995
    %2283 = vmatmul.bf16.gmra.mxu0 %v1397
    %v2284 = vpop.f32.mrf.mxu0
    %v2285 = vadd.f32 %v2272, %v2284
    %v2286 = vpop.f32.mrf.mxu0
    %2287 = vdwg.mxu0
    %2288 = vmatpush.bf16.msra.mxu0 %v1988
    %2289 = vmatpush.bf16.msra.mxu0 %v1980
    %2290 = vmatpush.bf16.msra.mxu0 %v1972
    %2291 = vmatpush.bf16.msra.mxu0 %v1964
    %2292 = vmatpush.bf16.msra.mxu0 %v1956
    %2293 = vmatpush.bf16.msra.mxu0 %v1948
    %2294 = vmatpush.bf16.msra.mxu0 %v1940
    %2295 = vmatpush.bf16.msra.mxu0 %v1932
    %2296 = vmatmul.bf16.gmra.mxu0 %v1396
    %v2297 = vpop.f32.mrf.mxu0
    %v2298 = vadd.f32 %v1532, %v2297
    %v2299 = vpop.f32.mrf.mxu0
    %2300 = vdwg.mxu0
    %2301 = vmatpush.bf16.msra.mxu0 %v2052
    %2302 = vmatpush.bf16.msra.mxu0 %v2044
    %2303 = vmatpush.bf16.msra.mxu0 %v2036
    %2304 = vmatpush.bf16.msra.mxu0 %v2028
    %2305 = vmatpush.bf16.msra.mxu0 %v2020
    %2306 = vmatpush.bf16.msra.mxu0 %v2012
    %2307 = vmatpush.bf16.msra.mxu0 %v2004
    %2308 = vmatpush.bf16.msra.mxu0 %v1996
    %2309 = vmatmul.bf16.gmra.mxu0 %v1397
    %v2310 = vpop.f32.mrf.mxu0
    %v2311 = vadd.f32 %v2298, %v2310
    %v2312 = vpop.f32.mrf.mxu0
    %2313 = vdwg.mxu0
    %2314 = vmatpush.bf16.msra.mxu0 %v1989
    %2315 = vmatpush.bf16.msra.mxu0 %v1981
    %2316 = vmatpush.bf16.msra.mxu0 %v1973
    %2317 = vmatpush.bf16.msra.mxu0 %v1965
    %2318 = vmatpush.bf16.msra.mxu0 %v1957
    %2319 = vmatpush.bf16.msra.mxu0 %v1949
    %2320 = vmatpush.bf16.msra.mxu0 %v1941
    %2321 = vmatpush.bf16.msra.mxu0 %v1933
    %2322 = vmatmul.bf16.gmra.mxu0 %v1396
    %v2323 = vpop.f32.mrf.mxu0
    %v2324 = vadd.f32 %v1533, %v2323
    %v2325 = vpop.f32.mrf.mxu0
    %2326 = vdwg.mxu0
    %2327 = vmatpush.bf16.msra.mxu0 %v2053
    %2328 = vmatpush.bf16.msra.mxu0 %v2045
    %2329 = vmatpush.bf16.msra.mxu0 %v2037
    %2330 = vmatpush.bf16.msra.mxu0 %v2029
    %2331 = vmatpush.bf16.msra.mxu0 %v2021
    %2332 = vmatpush.bf16.msra.mxu0 %v2013
    %2333 = vmatpush.bf16.msra.mxu0 %v2005
    %2334 = vmatpush.bf16.msra.mxu0 %v1997
    %2335 = vmatmul.bf16.gmra.mxu0 %v1397
    %v2336 = vpop.f32.mrf.mxu0
    %v2337 = vadd.f32 %v2324, %v2336
    %v2338 = vpop.f32.mrf.mxu0
    %2339 = vdwg.mxu0
    %2340 = vmatpush.bf16.msra.mxu0 %v1990
    %2341 = vmatpush.bf16.msra.mxu0 %v1982
    %2342 = vmatpush.bf16.msra.mxu0 %v1974
    %2343 = vmatpush.bf16.msra.mxu0 %v1966
    %2344 = vmatpush.bf16.msra.mxu0 %v1958
    %2345 = vmatpush.bf16.msra.mxu0 %v1950
    %2346 = vmatpush.bf16.msra.mxu0 %v1942
    %2347 = vmatpush.bf16.msra.mxu0 %v1934
    %2348 = vmatmul.bf16.gmra.mxu0 %v1396
    %v2349 = vpop.f32.mrf.mxu0
    %v2350 = vadd.f32 %v1534, %v2349
    %v2351 = vpop.f32.mrf.mxu0
    %2352 = vdwg.mxu0
    %2353 = vmatpush.bf16.msra.mxu0 %v2054
    %2354 = vmatpush.bf16.msra.mxu0 %v2046
    %2355 = vmatpush.bf16.msra.mxu0 %v2038
    %2356 = vmatpush.bf16.msra.mxu0 %v2030
    %2357 = vmatpush.bf16.msra.mxu0 %v2022
    %2358 = vmatpush.bf16.msra.mxu0 %v2014
    %2359 = vmatpush.bf16.msra.mxu0 %v2006
    %2360 = vmatpush.bf16.msra.mxu0 %v1998
    %2361 = vmatmul.bf16.gmra.mxu0 %v1397
    %v2362 = vpop.f32.mrf.mxu0
    %v2363 = vadd.f32 %v2350, %v2362
    %v2364 = vpop.f32.mrf.mxu0
    %2365 = vdwg.mxu0
    %2366 = vmatpush.bf16.msra.mxu0 %v1991
    %2367 = vmatpush.bf16.msra.mxu0 %v1983
    %2368 = vmatpush.bf16.msra.mxu0 %v1975
    %2369 = vmatpush.bf16.msra.mxu0 %v1967
    %2370 = vmatpush.bf16.msra.mxu0 %v1959
    %2371 = vmatpush.bf16.msra.mxu0 %v1951
    %2372 = vmatpush.bf16.msra.mxu0 %v1943
    %2373 = vmatpush.bf16.msra.mxu0 %v1935
    %2374 = vmatmul.bf16.gmra.mxu0 %v1396
    %v2375 = vpop.f32.mrf.mxu0
    %v2376 = vadd.f32 %v1535, %v2375
    %v2377 = vpop.f32.mrf.mxu0
    %2378 = vdwg.mxu0
    %2379 = vmatpush.bf16.msra.mxu0 %v2055
    %2380 = vmatpush.bf16.msra.mxu0 %v2047
    %2381 = vmatpush.bf16.msra.mxu0 %v2039
    %2382 = vmatpush.bf16.msra.mxu0 %v2031
    %2383 = vmatpush.bf16.msra.mxu0 %v2023
    %2384 = vmatpush.bf16.msra.mxu0 %v2015
    %2385 = vmatpush.bf16.msra.mxu0 %v2007
    %2386 = vmatpush.bf16.msra.mxu0 %v1999
    %2387 = vmatmul.bf16.gmra.mxu0 %v1397
    %v2388 = vpop.f32.mrf.mxu0
    %v2389 = vadd.f32 %v2376, %v2388
    %v2390 = vpop.f32.mrf.mxu0
    %2391 = vdwg.mxu0
    %v2392 = vpack.c.bf16 %v2233, %v2207
    %v2393 = vpack.c.bf16 %v2285, %v2259
    %v2394 = vpack.c.bf16 %v2337, %v2311
    %v2395 = vpack.c.bf16 %v2389, %v2363
    %v2400 = vrot.slane %v2392, 3
    %v2401 = vrot.slane %v2393, 6
    %v2402 = vrot.slane %v2393, 1
    %v2403 = vrot.slane %v2394, 4
    %v2404 = vrot.slane %v2394, 7
    %v2405 = vrot.slane %v2395, 2
    %v2406 = vrot.slane %v2395, 5
    %vm2407 = vcmask 1040384
    %v2410 = vsel %vm2407, %v2392, %v2400
    %vm2411 = vcmask 1042434
    %v2414 = vsel %vm2411, %v2401, %v2402
    %vm2415 = vcmask 1041408
    %v2416 = vsel %vm2415, %v2410, %v2414
    %vm2417 = vcmask 1044484
    %v2420 = vsel %vm2417, %v2403, %v2404
    %vm2421 = vcmask 1046534
    %v2424 = vsel %vm2421, %v2405, %v2406
    %vm2425 = vcmask 1045508
    %v2426 = vsel %vm2425, %v2420, %v2424
    %vm2427 = vcmask 1043456
    %v2428 = vsel %vm2427, %v2416, %v2426
    %2430 = vst [vmem:[#allocation13] sm:$0xff] %v2428
    // Predicated region
    $region54: #{tpu_custom_call.1} parent=1 // pred_check
      _
    $region55: #{tpu_custom_call.1} parent=1 // pred_check_branch
      %2432 = sbr.rel (0) target = $region57
    $region56: #{tpu_custom_call.1} parent=1 // pred_region
      %2434 = vsyncadd [#allocation4], 0
      %s2436 = sshll.u32 [#allocation13], 4
      %s2437 = int_to_ptr.vmem [resolvable:$true] %s2436
      %s2438 = sshll.u32 %s7, 4
      %s2439 = int_to_ptr.hbm [resolvable:$true] %s2438
      %2441 = dma.vmem_to_hbm [thread:$0]  %s2437, 128, %s2439, [#allocation4]
    $region57: #{tpu_custom_call.1} parent=1 // pred_fallthru
      _
    // Predicated region
    $region58: #{tpu_custom_call.1} parent=1 // pred_check
      _
    $region59: #{tpu_custom_call.1} parent=1 // pred_check_branch
      %2443 = sbr.rel (0) target = $region61
    $region60: #{tpu_custom_call.1} parent=1 // pred_region
      %2445 = dma.done [#allocation4], 128
    $region61: #{tpu_custom_call.1} parent=1 // pred_fallthru
      _
    %2446 = vsyncpa [#allocation3], 1
    %2447 = vsyncpa [#allocation6], 1
    %2448 = vsyncpa [#allocation9], 1
    %2449 = vsyncpa [#allocation12], 1
    %2450 = vsyncpa [#allocation4], 1

</llo_original>
